<compile_context>
chip_gen: v6e
topology: v6e:2x2x1
jax: 0.10.0
libtpu: 0.0.40
codegen_flags: <defaults>
</compile_context>

<pallas_src>
import functools

import jax
import jax.numpy as jnp
from jax import lax
from jax.experimental import pallas as pl
from jax.experimental.pallas import tpu as pltpu

BN_EPS = 1e-5


def _round_up(n, m):
    return ((n + m - 1) // m) * m


# --------------------------------------------------------------------------- #
# Kernels
# --------------------------------------------------------------------------- #
def _make_pass1_kernel(true_b, b_tile, needs_mask):
    """h1 = relu(W1 @ x^T + b1); write h1 tile; accumulate per-feature sum/sumsq."""

    def kernel(x_ref, p1_ref, h1_ref, st_ref):
        i = pl.program_id(0)
        x = x_ref[...]                      # (b_tile, 44)  batch on sublanes
        w1 = p1_ref[:, 0:44]                # (16, 44)
        b1 = p1_ref[:, 44:45]               # (16, 1)

        # (16,44) contracted with (b_tile,44) on dim 1 -> (16, b_tile):
        # batch lands on the lane axis with no HBM-side transpose of x.
        h = lax.dot_general(w1, x, (((1,), (1,)), ((), ())),
                            preferred_element_type=jnp.float32)
        h = jnp.maximum(h + b1, 0.0)
        h1_ref[...] = h

        @pl.when(i == 0)
        def _():
            st_ref[...] = jnp.zeros_like(st_ref)

        if needs_mask:  # static: only emitted when B was padded up to the grid
            col = i * b_tile + lax.broadcasted_iota(jnp.int32, (16, b_tile), 1)
            h = jnp.where(col < true_b, h, 0.0)
        st_ref[:, 0:1] += jnp.sum(h, axis=1, keepdims=True)
        st_ref[:, 1:2] += jnp.sum(h * h, axis=1, keepdims=True)

    return kernel


def _make_pass2_kernel(true_b, b_tile, needs_mask):
    """h2 = relu(W2_eff @ h1 + b2_eff) (BN1 folded); accumulate sum/sumsq of h2."""

    def kernel(h1_ref, p2_ref, st_ref):
        i = pl.program_id(0)
        h1 = h1_ref[...]                    # (16, b_tile)
        w2 = p2_ref[:, 0:16]                # (16, 16)  BN1-folded
        b2 = p2_ref[:, 16:17]               # (16, 1)   BN1-folded
        h2 = jnp.dot(w2, h1, preferred_element_type=jnp.float32) + b2
        h2 = jnp.maximum(h2, 0.0)

        @pl.when(i == 0)
        def _():
            st_ref[...] = jnp.zeros_like(st_ref)

        if needs_mask:
            col = i * b_tile + lax.broadcasted_iota(jnp.int32, (16, b_tile), 1)
            h2 = jnp.where(col < true_b, h2, 0.0)
        st_ref[:, 0:1] += jnp.sum(h2, axis=1, keepdims=True)
        st_ref[:, 1:2] += jnp.sum(h2 * h2, axis=1, keepdims=True)

    return kernel


def _pass3_kernel(h1_ref, p3_ref, o_ref):
    """Recompute h2 from h1; BN2 folded into layer 3; lane-dense (1, b_tile) out."""
    h1 = h1_ref[...]                        # (16, b_tile)
    w2 = p3_ref[:, 0:16]                    # (16, 16)  BN1-folded
    b2 = p3_ref[:, 16:17]                   # (16, 1)
    w3 = p3_ref[:, 17:18]                   # (16, 1)   BN2-folded layer-3 weight
    b3 = p3_ref[0:1, 18:19]                 # (1, 1)    BN2-folded layer-3 bias
    h2 = jnp.maximum(jnp.dot(w2, h1, preferred_element_type=jnp.float32) + b2, 0.0)
    # 16->1 layer as VPU mul + sublane (XLU) reduce; no M=1 MXU push.
    o_ref[...] = jnp.sum(h2 * w3, axis=0, keepdims=True) + b3


# --------------------------------------------------------------------------- #
# Wrapper
# --------------------------------------------------------------------------- #
def discriminator_forward(x, params, *, b_tile=8192):
    """x: (B, 44) float32.  Returns (B, 1), matching the PyTorch module."""
    B = x.shape[0]
    f32 = jnp.float32

    # Tile the batch on the lane axis; keep lane/sublane alignment.
    b_tile = max(128, min(int(b_tile), _round_up(B, 128)))
    b_tile = _round_up(b_tile, 128)
    B_pad = _round_up(B, b_tile)
    n_tiles = B_pad // b_tile
    needs_mask = B_pad != B

    x_pad = x if B_pad == B else jnp.pad(x, ((0, B_pad - B), (0, 0)))

    # ---- pass 1: layer 1 + ReLU, h1 to HBM, accumulate BN1 stats -------------
    p1 = jnp.concatenate([params["w1"], params["b1"][:, None]], axis=1)  # (16,45)
    h1, st1 = pl.pallas_call(
        _make_pass1_kernel(B, b_tile, needs_mask),
        grid=(n_tiles,),
        in_specs=[
            pl.BlockSpec((b_tile, 44), lambda i: (i, 0)),
            pl.BlockSpec((16, 45), lambda i: (0, 0)),
        ],
        out_specs=(
            pl.BlockSpec((16, b_tile), lambda i: (0, i)),
            pl.BlockSpec((16, 2), lambda i: (0, 0)),   # resident accumulator
        ),
        out_shape=(
            jax.ShapeDtypeStruct((16, B_pad), f32),
            jax.ShapeDtypeStruct((16, 2), f32),
        ),
        compiler_params=pltpu.CompilerParams(dimension_semantics=("arbitrary",)),
    )(x_pad, p1)

    # ---- tiny glue: fold BN1 (exact affine) into layer 2 ---------------------
    mean1 = st1[:, 0] / B
    var1 = st1[:, 1] / B - mean1 * mean1
    scale1 = params["gamma1"] * lax.rsqrt(var1 + BN_EPS)
    shift1 = params["beta1"] - mean1 * scale1
    w2_eff = params["w2"] * scale1[None, :]
    b2_eff = params["b2"] + params["w2"] @ shift1
    p2 = jnp.concatenate([w2_eff, b2_eff[:, None]], axis=1)            # (16,17)

    # ---- pass 2: layer 2 + ReLU, accumulate BN2 stats -------------------------
    st2 = pl.pallas_call(
        _make_pass2_kernel(B, b_tile, needs_mask),
        grid=(n_tiles,),
        in_specs=[
            pl.BlockSpec((16, b_tile), lambda i: (0, i)),
            pl.BlockSpec((16, 17), lambda i: (0, 0)),
        ],
        out_specs=pl.BlockSpec((16, 2), lambda i: (0, 0)),
        out_shape=jax.ShapeDtypeStruct((16, 2), f32),
        compiler_params=pltpu.CompilerParams(dimension_semantics=("arbitrary",)),
    )(h1, p2)

    # ---- tiny glue: fold BN2 into layer 3 -------------------------------------
    mean2 = st2[:, 0] / B
    var2 = st2[:, 1] / B - mean2 * mean2
    scale2 = params["gamma2"] * lax.rsqrt(var2 + BN_EPS)
    shift2 = params["beta2"] - mean2 * scale2
    w3_eff = params["w3"][0] * scale2                                   # (16,)
    b3_eff = params["b3"][0] + jnp.dot(params["w3"][0], shift2)         # scalar
    b3_col = jnp.zeros((16, 1), f32).at[0, 0].set(b3_eff)
    p3 = jnp.concatenate(
        [w2_eff, b2_eff[:, None], w3_eff[:, None], b3_col], axis=1)     # (16,19)

    # ---- pass 3: recompute h2, apply folded BN2 + layer 3, emit output --------
    out_pad = pl.pallas_call(
        _pass3_kernel,
        grid=(n_tiles,),
        in_specs=[
            pl.BlockSpec((16, b_tile), lambda i: (0, i)),
            pl.BlockSpec((16, 19), lambda i: (0, 0)),
        ],
        out_specs=pl.BlockSpec((1, b_tile), lambda i: (0, i)),
        out_shape=jax.ShapeDtypeStruct((1, B_pad), f32),
        compiler_params=pltpu.CompilerParams(dimension_semantics=("parallel",)),
    )(h1, p3)

    return out_pad[0, :B, None]                                         # (B, 1)


# --------------------------------------------------------------------------- #
# Parameter sampling (blitz-style, deterministic) + reference
# --------------------------------------------------------------------------- #
def _sample_bayesian_linear(key, in_f, out_f):
    """Deterministically sample W = mu + softplus(rho)*eps (blitz-style)."""
    k_mu, k_eps, k_bmu, k_beps = jax.random.split(key, 4)
    w_mu = 0.1 * jax.random.normal(k_mu, (out_f, in_f), jnp.float32)
    w_rho = jnp.full((out_f, in_f), -7.0, jnp.float32)
    w_eps = jax.random.normal(k_eps, (out_f, in_f), jnp.float32)
    w = w_mu + jnp.log1p(jnp.exp(w_rho)) * w_eps

    b_mu = 0.1 * jax.random.normal(k_bmu, (out_f,), jnp.float32)
    b_rho = jnp.full((out_f,), -7.0, jnp.float32)
    b_eps = jax.random.normal(k_beps, (out_f,), jnp.float32)
    b = b_mu + jnp.log1p(jnp.exp(b_rho)) * b_eps
    return w, b


def init_params(key):
    k1, k2, k3 = jax.random.split(key, 3)
    w1, b1 = _sample_bayesian_linear(k1, 44, 16)   # (16,44), (16,)
    w2, b2 = _sample_bayesian_linear(k2, 16, 16)   # (16,16), (16,)
    w3, b3 = _sample_bayesian_linear(k3, 16, 1)    # (1,16),  (1,)
    return {
        "w1": w1, "b1": b1,
        "gamma1": jnp.ones((16,), jnp.float32),
        "beta1": jnp.zeros((16,), jnp.float32),
        "w2": w2, "b2": b2,
        "gamma2": jnp.ones((16,), jnp.float32),
        "beta2": jnp.zeros((16,), jnp.float32),
        "w3": w3, "b3": b3,
    }


def _reference_forward(x, p):
    h = jnp.maximum(x @ p["w1"].T + p["b1"], 0.0)
    m, v = jnp.mean(h, 0, keepdims=True), jnp.var(h, 0, keepdims=True)
    h = (h - m) * lax.rsqrt(v + BN_EPS) * p["gamma1"] + p["beta1"]
    h = jnp.maximum(h @ p["w2"].T + p["b2"], 0.0)
    m, v = jnp.mean(h, 0, keepdims=True), jnp.var(h, 0, keepdims=True)
    h = (h - m) * lax.rsqrt(v + BN_EPS) * p["gamma2"] + p["beta2"]
    return h @ p["w3"].T + p["b3"]


if __name__ == "__main__":
    key = jax.random.PRNGKey(0)
    k_x, k_p = jax.random.split(key)

    # B deliberately NOT a multiple of the tile so the multi-tile grid, padding
    # and the masked stats path are all exercised (b_tile=128 -> 3 tiles).
    B = 300
    x = jax.random.normal(k_x, (B, 44), jnp.float32)
    params = init_params(k_p)

    fwd = jax.jit(functools.partial(discriminator_forward, b_tile=128))
    out = jax.block_until_ready(fwd(x, params))

    ref = _reference_forward(x, params)
    assert out.shape == (B, 1)
    assert jnp.allclose(out, ref, atol=2e-4, rtol=2e-4), "mismatch vs reference"

    print("KERNEL_OK")
</pallas_src>

<mosaic_0001>
module attributes {stable_mosaic.version = 11 : i64} {
  func.func @kernel(%arg0: i32, %arg1: memref<128x44xf32, #tpu.memory_space<vmem>>, %arg2: memref<16x45xf32, #tpu.memory_space<vmem>>, %arg3: memref<16x128xf32, #tpu.memory_space<vmem>>, %arg4: memref<16x2xf32, #tpu.memory_space<vmem>>) attributes {dimension_semantics = [#tpu.dimension_semantics<arbitrary>], iteration_bounds = array<i64: 3>, scalar_prefetch = 0 : i64, scratch_operands = 0 : i64, tpu.core_type = #tpu.core_type<tc>, window_params = [{transform_indices = @transform_0, window_bounds = array<i64: 128, 44>}, {pipeline_mode = #tpu.pipeline_mode<synchronous>, transform_indices = @transform_1, window_bounds = array<i64: 16, 45>}, {transform_indices = @transform_2, window_bounds = array<i64: 16, 128>}, {pipeline_mode = #tpu.pipeline_mode<synchronous>, transform_indices = @transform_3, window_bounds = array<i64: 16, 2>}]} {
    %c0 = arith.constant 0 : index
    %c0_0 = arith.constant 0 : index
    %0 = vector.load %arg1[%c0, %c0_0] : memref<128x44xf32, #tpu.memory_space<vmem>>, vector<128x44xf32>
    %c0_1 = arith.constant 0 : index
    %c0_2 = arith.constant 0 : index
    %1 = vector.load %arg2[%c0_1, %c0_2] : memref<16x45xf32, #tpu.memory_space<vmem>>, vector<16x44xf32>
    %c0_3 = arith.constant 0 : index
    %c44 = arith.constant 44 : index
    %2 = vector.load %arg2[%c0_3, %c44] : memref<16x45xf32, #tpu.memory_space<vmem>>, vector<16x1xf32>
    %cst = arith.constant dense<0.000000e+00> : vector<16x128xf32>
    %3 = tpu.matmul %1, %0, %cst {dimension_numbers = #tpu.dot_dimension_numbers<[1], [1], [0], [0], [0, 0, 1, 0], [], []>} : vector<16x44xf32>, vector<128x44xf32>, vector<16x128xf32> -> vector<16x128xf32>
    %4 = vector.broadcast %2 : vector<16x1xf32> to vector<16x128xf32>
    %5 = arith.addf %3, %4 : vector<16x128xf32>
    %cst_4 = arith.constant 0.000000e+00 : f32
    %6 = vector.broadcast %cst_4 : f32 to vector<16x128xf32>
    %7 = arith.maximumf %5, %6 : vector<16x128xf32>
    %c0_5 = arith.constant 0 : index
    %c0_6 = arith.constant 0 : index
    %8 = vector.load %arg3[%c0_5, %c0_6] : memref<16x128xf32, #tpu.memory_space<vmem>>, vector<16x128xf32>
    tpu.vector_store %arg3[%c0_5, %c0_6], %7 {strides = array<i32>} : memref<16x128xf32, #tpu.memory_space<vmem>>, vector<16x128xf32>,
    %c0_i32 = arith.constant 0 : i32
    %9 = arith.cmpi eq, %arg0, %c0_i32 : i32
    %10 = arith.extui %9 : i1 to i32
    %c0_i32_7 = arith.constant 0 : i32
    %11 = arith.cmpi ne, %10, %c0_i32_7 : i32
    scf.if %11 {
      %cst_18 = arith.constant 0.000000e+00 : f32
      %31 = vector.broadcast %cst_18 : f32 to vector<16x2xf32>
      %c0_19 = arith.constant 0 : index
      %c0_20 = arith.constant 0 : index
      %32 = vector.load %arg4[%c0_19, %c0_20] : memref<16x2xf32, #tpu.memory_space<vmem>>, vector<16x2xf32>
      tpu.vector_store %arg4[%c0_19, %c0_20], %31 {strides = array<i32>} : memref<16x2xf32, #tpu.memory_space<vmem>>, vector<16x2xf32>,
    } else {
    }
    %c128_i32 = arith.constant 128 : i32
    %12 = arith.muli %arg0, %c128_i32 : i32
    %13 = tpu.iota {dimensions = array<i32: 1>} : vector<16x128xi32>
    %14 = vector.broadcast %12 : i32 to vector<16x128xi32>
    %15 = arith.addi %14, %13 : vector<16x128xi32>
    %c300_i32 = arith.constant 300 : i32
    %16 = vector.broadcast %c300_i32 : i32 to vector<16x128xi32>
    %17 = arith.cmpi slt, %15, %16 : vector<16x128xi32>
    %cst_8 = arith.constant 0.000000e+00 : f32
    %18 = vector.broadcast %cst_8 : f32 to vector<16x128xf32>
    %19 = arith.select %17, %7, %18 : vector<16x128xi1>, vector<16x128xf32>
    %c0_9 = arith.constant 0 : index
    %c0_10 = arith.constant 0 : index
    %20 = vector.load %arg4[%c0_9, %c0_10] : memref<16x2xf32, #tpu.memory_space<vmem>>, vector<16x1xf32>
    %cst_11 = arith.constant dense<0.000000e+00> : vector<16xf32>
    %21 = vector.multi_reduction <add>, %19, %cst_11 [1] : vector<16x128xf32> to vector<16xf32>
    %22 = vector.shape_cast %21 : vector<16xf32> to vector<16x1xf32>
    %23 = arith.addf %20, %22 : vector<16x1xf32>
    %c0_12 = arith.constant 0 : index
    %c0_13 = arith.constant 0 : index
    %24 = vector.load %arg4[%c0_12, %c0_13] : memref<16x2xf32, #tpu.memory_space<vmem>>, vector<16x1xf32>
    tpu.vector_store %arg4[%c0_12, %c0_13], %23 {strides = array<i32>} : memref<16x2xf32, #tpu.memory_space<vmem>>, vector<16x1xf32>,
    %c0_14 = arith.constant 0 : index
    %c1 = arith.constant 1 : index
    %25 = vector.load %arg4[%c0_14, %c1] : memref<16x2xf32, #tpu.memory_space<vmem>>, vector<16x1xf32>
    %26 = arith.mulf %19, %19 : vector<16x128xf32>
    %cst_15 = arith.constant dense<0.000000e+00> : vector<16xf32>
    %27 = vector.multi_reduction <add>, %26, %cst_15 [1] : vector<16x128xf32> to vector<16xf32>
    %28 = vector.shape_cast %27 : vector<16xf32> to vector<16x1xf32>
    %29 = arith.addf %25, %28 : vector<16x1xf32>
    %c0_16 = arith.constant 0 : index
    %c1_17 = arith.constant 1 : index
    %30 = vector.load %arg4[%c0_16, %c1_17] : memref<16x2xf32, #tpu.memory_space<vmem>>, vector<16x1xf32>
    tpu.vector_store %arg4[%c0_16, %c1_17], %29 {strides = array<i32>} : memref<16x2xf32, #tpu.memory_space<vmem>>, vector<16x1xf32>,
    return
  }
  func.func @transform_0(%arg0: i32) -> (i32, i32) {
    %c0_i32 = arith.constant 0 : i32
    %c0_i32_0 = arith.constant 0 : i32
    return %arg0, %c0_i32 : i32, i32
  }
  func.func @transform_1(%arg0: i32) -> (i32, i32) {
    %c0_i32 = arith.constant 0 : i32
    %c0_i32_0 = arith.constant 0 : i32
    %c0_i32_1 = arith.constant 0 : i32
    return %c0_i32, %c0_i32_0 : i32, i32
  }
  func.func @transform_2(%arg0: i32) -> (i32, i32) {
    %c0_i32 = arith.constant 0 : i32
    %c0_i32_0 = arith.constant 0 : i32
    return %c0_i32, %arg0 : i32, i32
  }
  func.func @transform_3(%arg0: i32) -> (i32, i32) {
    %c0_i32 = arith.constant 0 : i32
    %c0_i32_0 = arith.constant 0 : i32
    %c0_i32_1 = arith.constant 0 : i32
    return %c0_i32, %c0_i32_0 : i32, i32
  }
}

module attributes {stable_mosaic.version = 11 : i64} {
  func.func @_pass3_kernel(%arg0: i32, %arg1: memref<16x128xf32, #tpu.memory_space<vmem>>, %arg2: memref<16x19xf32, #tpu.memory_space<vmem>>, %arg3: memref<1x128xf32, #tpu.memory_space<vmem>>) attributes {dimension_semantics = [#tpu.dimension_semantics<parallel>], iteration_bounds = array<i64: 3>, scalar_prefetch = 0 : i64, scratch_operands = 0 : i64, tpu.core_type = #tpu.core_type<tc>, window_params = [{transform_indices = @transform_0, window_bounds = array<i64: 16, 128>}, {pipeline_mode = #tpu.pipeline_mode<synchronous>, transform_indices = @transform_1, window_bounds = array<i64: 16, 19>}, {transform_indices = @transform_2, window_bounds = array<i64: 1, 128>}]} {
    %c0 = arith.constant 0 : index
    %c0_0 = arith.constant 0 : index
    %0 = vector.load %arg1[%c0, %c0_0] : memref<16x128xf32, #tpu.memory_space<vmem>>, vector<16x128xf32>
    %c0_1 = arith.constant 0 : index
    %c0_2 = arith.constant 0 : index
    %1 = vector.load %arg2[%c0_1, %c0_2] : memref<16x19xf32, #tpu.memory_space<vmem>>, vector<16x16xf32>
    %c0_3 = arith.constant 0 : index
    %c16 = arith.constant 16 : index
    %2 = vector.load %arg2[%c0_3, %c16] : memref<16x19xf32, #tpu.memory_space<vmem>>, vector<16x1xf32>
    %c0_4 = arith.constant 0 : index
    %c17 = arith.constant 17 : index
    %3 = vector.load %arg2[%c0_4, %c17] : memref<16x19xf32, #tpu.memory_space<vmem>>, vector<16x1xf32>
    %c0_5 = arith.constant 0 : index
    %c18 = arith.constant 18 : index
    %4 = vector.load %arg2[%c0_5, %c18] : memref<16x19xf32, #tpu.memory_space<vmem>>, vector<1x1xf32>
    %cst = arith.constant dense<0.000000e+00> : vector<16x128xf32>
    %5 = tpu.matmul %1, %0, %cst {dimension_numbers = #tpu.dot_dimension_numbers<[1], [0], [0], [1], [0, 0, 1, 1], [], []>} : vector<16x16xf32>, vector<16x128xf32>, vector<16x128xf32> -> vector<16x128xf32>
    %6 = vector.broadcast %2 : vector<16x1xf32> to vector<16x128xf32>
    %7 = arith.addf %5, %6 : vector<16x128xf32>
    %cst_6 = arith.constant 0.000000e+00 : f32
    %8 = vector.broadcast %cst_6 : f32 to vector<16x128xf32>
    %9 = arith.maximumf %7, %8 : vector<16x128xf32>
    %10 = vector.broadcast %3 : vector<16x1xf32> to vector<16x128xf32>
    %11 = arith.mulf %9, %10 : vector<16x128xf32>
    %cst_7 = arith.constant dense<0.000000e+00> : vector<128xf32>
    %12 = vector.multi_reduction <add>, %11, %cst_7 [0] : vector<16x128xf32> to vector<128xf32>
    %13 = vector.shape_cast %12 : vector<128xf32> to vector<1x128xf32>
    %14 = vector.broadcast %4 : vector<1x1xf32> to vector<1x128xf32>
    %15 = arith.addf %13, %14 : vector<1x128xf32>
    %c0_8 = arith.constant 0 : index
    %c0_9 = arith.constant 0 : index
    %16 = vector.load %arg3[%c0_8, %c0_9] : memref<1x128xf32, #tpu.memory_space<vmem>>, vector<1x128xf32>
    tpu.vector_store %arg3[%c0_8, %c0_9], %15 {strides = array<i32>} : memref<1x128xf32, #tpu.memory_space<vmem>>, vector<1x128xf32>,
    return
  }
  func.func @transform_0(%arg0: i32) -> (i32, i32) {
    %c0_i32 = arith.constant 0 : i32
    %c0_i32_0 = arith.constant 0 : i32
    return %c0_i32, %arg0 : i32, i32
  }
  func.func @transform_1(%arg0: i32) -> (i32, i32) {
    %c0_i32 = arith.constant 0 : i32
    %c0_i32_0 = arith.constant 0 : i32
    %c0_i32_1 = arith.constant 0 : i32
    return %c0_i32, %c0_i32_0 : i32, i32
  }
  func.func @transform_2(%arg0: i32) -> (i32, i32) {
    %c0_i32 = arith.constant 0 : i32
    %c0_i32_0 = arith.constant 0 : i32
    return %c0_i32, %arg0 : i32, i32
  }
}

module attributes {stable_mosaic.version = 11 : i64} {
  func.func @kernel(%arg0: i32, %arg1: memref<16x128xf32, #tpu.memory_space<vmem>>, %arg2: memref<16x17xf32, #tpu.memory_space<vmem>>, %arg3: memref<16x2xf32, #tpu.memory_space<vmem>>) attributes {dimension_semantics = [#tpu.dimension_semantics<arbitrary>], iteration_bounds = array<i64: 3>, scalar_prefetch = 0 : i64, scratch_operands = 0 : i64, tpu.core_type = #tpu.core_type<tc>, window_params = [{transform_indices = @transform_0, window_bounds = array<i64: 16, 128>}, {pipeline_mode = #tpu.pipeline_mode<synchronous>, transform_indices = @transform_1, window_bounds = array<i64: 16, 17>}, {pipeline_mode = #tpu.pipeline_mode<synchronous>, transform_indices = @transform_2, window_bounds = array<i64: 16, 2>}]} {
    %c0 = arith.constant 0 : index
    %c0_0 = arith.constant 0 : index
    %0 = vector.load %arg1[%c0, %c0_0] : memref<16x128xf32, #tpu.memory_space<vmem>>, vector<16x128xf32>
    %c0_1 = arith.constant 0 : index
    %c0_2 = arith.constant 0 : index
    %1 = vector.load %arg2[%c0_1, %c0_2] : memref<16x17xf32, #tpu.memory_space<vmem>>, vector<16x16xf32>
    %c0_3 = arith.constant 0 : index
    %c16 = arith.constant 16 : index
    %2 = vector.load %arg2[%c0_3, %c16] : memref<16x17xf32, #tpu.memory_space<vmem>>, vector<16x1xf32>
    %cst = arith.constant dense<0.000000e+00> : vector<16x128xf32>
    %3 = tpu.matmul %1, %0, %cst {dimension_numbers = #tpu.dot_dimension_numbers<[1], [0], [0], [1], [0, 0, 1, 1], [], []>} : vector<16x16xf32>, vector<16x128xf32>, vector<16x128xf32> -> vector<16x128xf32>
    %4 = vector.broadcast %2 : vector<16x1xf32> to vector<16x128xf32>
    %5 = arith.addf %3, %4 : vector<16x128xf32>
    %cst_4 = arith.constant 0.000000e+00 : f32
    %6 = vector.broadcast %cst_4 : f32 to vector<16x128xf32>
    %7 = arith.maximumf %5, %6 : vector<16x128xf32>
    %c0_i32 = arith.constant 0 : i32
    %8 = arith.cmpi eq, %arg0, %c0_i32 : i32
    %9 = arith.extui %8 : i1 to i32
    %c0_i32_5 = arith.constant 0 : i32
    %10 = arith.cmpi ne, %9, %c0_i32_5 : i32
    scf.if %10 {
      %cst_16 = arith.constant 0.000000e+00 : f32
      %30 = vector.broadcast %cst_16 : f32 to vector<16x2xf32>
      %c0_17 = arith.constant 0 : index
      %c0_18 = arith.constant 0 : index
      %31 = vector.load %arg3[%c0_17, %c0_18] : memref<16x2xf32, #tpu.memory_space<vmem>>, vector<16x2xf32>
      tpu.vector_store %arg3[%c0_17, %c0_18], %30 {strides = array<i32>} : memref<16x2xf32, #tpu.memory_space<vmem>>, vector<16x2xf32>,
    } else {
    }
    %c128_i32 = arith.constant 128 : i32
    %11 = arith.muli %arg0, %c128_i32 : i32
    %12 = tpu.iota {dimensions = array<i32: 1>} : vector<16x128xi32>
    %13 = vector.broadcast %11 : i32 to vector<16x128xi32>
    %14 = arith.addi %13, %12 : vector<16x128xi32>
    %c300_i32 = arith.constant 300 : i32
    %15 = vector.broadcast %c300_i32 : i32 to vector<16x128xi32>
    %16 = arith.cmpi slt, %14, %15 : vector<16x128xi32>
    %cst_6 = arith.constant 0.000000e+00 : f32
    %17 = vector.broadcast %cst_6 : f32 to vector<16x128xf32>
    %18 = arith.select %16, %7, %17 : vector<16x128xi1>, vector<16x128xf32>
    %c0_7 = arith.constant 0 : index
    %c0_8 = arith.constant 0 : index
    %19 = vector.load %arg3[%c0_7, %c0_8] : memref<16x2xf32, #tpu.memory_space<vmem>>, vector<16x1xf32>
    %cst_9 = arith.constant dense<0.000000e+00> : vector<16xf32>
    %20 = vector.multi_reduction <add>, %18, %cst_9 [1] : vector<16x128xf32> to vector<16xf32>
    %21 = vector.shape_cast %20 : vector<16xf32> to vector<16x1xf32>
    %22 = arith.addf %19, %21 : vector<16x1xf32>
    %c0_10 = arith.constant 0 : index
    %c0_11 = arith.constant 0 : index
    %23 = vector.load %arg3[%c0_10, %c0_11] : memref<16x2xf32, #tpu.memory_space<vmem>>, vector<16x1xf32>
    tpu.vector_store %arg3[%c0_10, %c0_11], %22 {strides = array<i32>} : memref<16x2xf32, #tpu.memory_space<vmem>>, vector<16x1xf32>,
    %c0_12 = arith.constant 0 : index
    %c1 = arith.constant 1 : index
    %24 = vector.load %arg3[%c0_12, %c1] : memref<16x2xf32, #tpu.memory_space<vmem>>, vector<16x1xf32>
    %25 = arith.mulf %18, %18 : vector<16x128xf32>
    %cst_13 = arith.constant dense<0.000000e+00> : vector<16xf32>
    %26 = vector.multi_reduction <add>, %25, %cst_13 [1] : vector<16x128xf32> to vector<16xf32>
    %27 = vector.shape_cast %26 : vector<16xf32> to vector<16x1xf32>
    %28 = arith.addf %24, %27 : vector<16x1xf32>
    %c0_14 = arith.constant 0 : index
    %c1_15 = arith.constant 1 : index
    %29 = vector.load %arg3[%c0_14, %c1_15] : memref<16x2xf32, #tpu.memory_space<vmem>>, vector<16x1xf32>
    tpu.vector_store %arg3[%c0_14, %c1_15], %28 {strides = array<i32>} : memref<16x2xf32, #tpu.memory_space<vmem>>, vector<16x1xf32>,
    return
  }
  func.func @transform_0(%arg0: i32) -> (i32, i32) {
    %c0_i32 = arith.constant 0 : i32
    %c0_i32_0 = arith.constant 0 : i32
    return %c0_i32, %arg0 : i32, i32
  }
  func.func @transform_1(%arg0: i32) -> (i32, i32) {
    %c0_i32 = arith.constant 0 : i32
    %c0_i32_0 = arith.constant 0 : i32
    %c0_i32_1 = arith.constant 0 : i32
    return %c0_i32, %c0_i32_0 : i32, i32
  }
  func.func @transform_2(%arg0: i32) -> (i32, i32) {
    %c0_i32 = arith.constant 0 : i32
    %c0_i32_0 = arith.constant 0 : i32
    %c0_i32_1 = arith.constant 0 : i32
    return %c0_i32, %c0_i32_0 : i32, i32
  }
}

</mosaic_0001>

<llo_original>
// kernel: discriminator_forward.3
$region0: #{discriminator_forward.3}
  #allocation0 [shape = 'u32[]', space=smem, size = 0x4, offset = 0x4, fixed_abs, tag = 'smem constant byte address 0x4 - core index']
  #allocation1 [shape = 'u32[144,128]{1,0:T(1,128)}', space=vmem, size = 0x12000, scoped, tag = 'internal scratch']
  %s0 = inlined_call_operand.vmem [shape: f32[384,44], index: 0, kind: input, shape index: {}]
  %s1 = inlined_call_operand.vmem [shape: f32[16,45], index: 1, kind: input, shape index: {}]
  %s2 = inlined_call_operand.vmem [shape: f32[16,384], index: 2, kind: output, shape index: {0}]
  %s3 = inlined_call_operand.vmem [shape: f32[16,2], index: 3, kind: output, shape index: {1}]
  %4 = xla_tuple %s2, %s3
  %s5 = sld [smem:[#allocation0]]
  $region87: #{discriminator_forward.3} parent=0
    _
  %s7 = ssub.s32 1, %s5
  %s8 = scalar_select 0, %s7, %s5
  $region1: #{discriminator_forward.3} parent=0
    #allocation2 [shape = 'u8[16384]{0}', space=vmem, size = 0x4000, scoped, tag = 'output window, operand 0']
    loop: start=0, step=1, limit=5
    $region2: #{discriminator_forward.3} parent=1 // loop_pre_header
      _
    $region3: #{discriminator_forward.3} parent=1 // loop_header
      %s10 = sphi 0, %s14
      %p11 = scmp.ge.s32.totalorder %s10, 5
      %s20 = sphi 0, %s22
      %s23 = sphi 0, %s20
      %s24 = sphi 0, %s23
      %s40 = sphi 0, %s24
      %s44 = sphi 0, %s44
      %s46 = sphi 0, %s44
      %s47 = sphi 0, %s46
      %s61 = sphi 0, %s47
      %s67 = sphi 0, %s69
      %s70 = sphi 0, %s67
      %s71 = sphi 0, %s70
      %s87 = sphi 0, %s71
      %s91 = sphi 0, %s91
      %s93 = sphi 0, %s91
      %s94 = sphi 0, %s93
      %s108 = sphi 0, %s94
    $region4: #{discriminator_forward.3} parent=1 // loop_header_branch
      %13 = sbr.rel (%p11) target = $region8
    $region5: #{discriminator_forward.3} parent=1 // loop_body
      %s15 = ssub.s32 %s10, 1
      %s16 = ssub.s32 %s10, 2
      %s17 = sadd.s32 %s10, 1
      %s18 = ssub.s32 %s10, %s17
      %p19 = scmp.eq.s32.totalorder %s18, 0
      %s21 = sadd.s32 %s20, 1
      %s22 = scalar_select %p19, %s20, %s21
      %p25 = pneg %p19
      %p26 = scmp.eq.s32.totalorder %s10, 2
      %p27 = por %p25, %p26
      %p28 = scmp.ne.s32.totalorder %s20, %s23
      %p29 = scmp.eq.s32.totalorder %s10, 0
      %p30 = por %p28, %p29
      %p31 = scmp.ne.s32.totalorder %s20, %s23
      %p32 = scmp.eq.s32.totalorder %s15, 2
      %p33 = por %p31, %p32
      %p34 = scmp.ne.s32.totalorder %s23, %s24
      %p35 = scmp.eq.s32.totalorder %s15, 0
      %p36 = por %p34, %p35
      %p37 = scmp.ne.s32.totalorder %s23, %s24
      %p38 = scmp.eq.s32.totalorder %s16, 2
      %p39 = por %p37, %p38
      %p41 = scmp.ne.s32.totalorder %s24, %s40
      %p42 = scmp.eq.s32.totalorder %s16, 0
      %p43 = por %p41, %p42
      %s45 = sadd.s32 %s44, 1
      %p48 = scmp.eq.s32.totalorder %s10, 2
      %p49 = scmp.ne.s32.totalorder %s44, %s46
      %p50 = scmp.eq.s32.totalorder %s10, 0
      %p51 = por %p49, %p50
      %p52 = scmp.ne.s32.totalorder %s44, %s46
      %p53 = scmp.eq.s32.totalorder %s15, 2
      %p54 = por %p52, %p53
      %p55 = scmp.ne.s32.totalorder %s46, %s47
      %p56 = scmp.eq.s32.totalorder %s15, 0
      %p57 = por %p55, %p56
      %p58 = scmp.ne.s32.totalorder %s46, %s47
      %p59 = scmp.eq.s32.totalorder %s16, 2
      %p60 = por %p58, %p59
      %p62 = scmp.ne.s32.totalorder %s47, %s61
      %p63 = scmp.eq.s32.totalorder %s16, 0
      %p64 = por %p62, %p63
      %s65 = ssub.s32 %s10, %s17
      %p66 = scmp.eq.s32.totalorder %s65, 0
      %s68 = sadd.s32 %s67, 1
      %s69 = scalar_select %p66, %s67, %s68
      %p72 = pneg %p66
      %p73 = scmp.eq.s32.totalorder %s10, 2
      %p74 = por %p72, %p73
      %p75 = scmp.ne.s32.totalorder %s67, %s70
      %p76 = scmp.eq.s32.totalorder %s10, 0
      %p77 = por %p75, %p76
      %p78 = scmp.ne.s32.totalorder %s67, %s70
      %p79 = scmp.eq.s32.totalorder %s15, 2
      %p80 = por %p78, %p79
      %p81 = scmp.ne.s32.totalorder %s70, %s71
      %p82 = scmp.eq.s32.totalorder %s15, 0
      %p83 = por %p81, %p82
      %p84 = scmp.ne.s32.totalorder %s70, %s71
      %p85 = scmp.eq.s32.totalorder %s16, 2
      %p86 = por %p84, %p85
      %p88 = scmp.ne.s32.totalorder %s71, %s87
      %p89 = scmp.eq.s32.totalorder %s16, 0
      %p90 = por %p88, %p89
      %s92 = sadd.s32 %s91, 1
      %p95 = scmp.eq.s32.totalorder %s10, 2
      %p96 = scmp.ne.s32.totalorder %s91, %s93
      %p97 = scmp.eq.s32.totalorder %s10, 0
      %p98 = por %p96, %p97
      %p99 = scmp.ne.s32.totalorder %s91, %s93
      %p100 = scmp.eq.s32.totalorder %s15, 2
      %p101 = por %p99, %p100
      %p102 = scmp.ne.s32.totalorder %s93, %s94
      %p103 = scmp.eq.s32.totalorder %s15, 0
      %p104 = por %p102, %p103
      %p105 = scmp.ne.s32.totalorder %s93, %s94
      %p106 = scmp.eq.s32.totalorder %s16, 2
      %p107 = por %p105, %p106
      %p109 = scmp.ne.s32.totalorder %s94, %s108
      %p110 = scmp.eq.s32.totalorder %s16, 0
      %p111 = por %p109, %p110
      %p112 = scmp.le.s32.totalorder 1, %s10
      %p113 = scmp.lt.s32.totalorder %s10, 4
      %p114 = pnand %p112, %p113
      %p115 = pneg %p114
      // Predicated region
      $region9: #{discriminator_forward.3} parent=5 // pred_check
        _
      $region10: #{discriminator_forward.3} parent=5 // pred_check_branch
        %117 = sbr.rel (%p114) target = $region12
      $region11: #{discriminator_forward.3} parent=5 // pred_region
        %s118 = ssub.s32 %s10, 1
        // Predicated region
        $region13: #{discriminator_forward.3} parent=11 // pred_check
          %p119 = pneg %p57
        $region14: #{discriminator_forward.3} parent=11 // pred_check_branch
          %121 = sbr.rel (%p119) target = $region16
        $region15: #{discriminator_forward.3} parent=11 // pred_region
          _
        $region16: #{discriminator_forward.3} parent=11 // pred_fallthru
          _
      $region12: #{discriminator_forward.3} parent=5 // pred_fallthru
        _
      %p122 = scmp.lt.s32.totalorder %s10, 3
      // Predicated region
      $region17: #{discriminator_forward.3} parent=5 // pred_check
        %p123 = pneg %p122
      $region18: #{discriminator_forward.3} parent=5 // pred_check_branch
        %125 = sbr.rel (%p123) target = $region20
      $region19: #{discriminator_forward.3} parent=5 // pred_region
        // Predicated region
        $region21: #{discriminator_forward.3} parent=19 // pred_check
          %p126 = pneg %p30
        $region22: #{discriminator_forward.3} parent=19 // pred_check_branch
          %128 = sbr.rel (%p126) target = $region24
        $region23: #{discriminator_forward.3} parent=19 // pred_region
          %s129 = smul.u32 16, %s10
          %p130 = scmp.lt.s32.totalorder %s129, 47
          %s131 = scalar_select %p130, %s129, 47
          %s132 = smul.addr %s131, 8
          %s133 = scalar_lea.vmem %s0, %s132
          %s134 = smul.u32 16, %s10
        $region24: #{discriminator_forward.3} parent=19 // pred_fallthru
          _
      $region20: #{discriminator_forward.3} parent=5 // pred_fallthru
        _
      %p135 = scmp.le.s32.totalorder 1, %s10
      %p136 = scmp.lt.s32.totalorder %s10, 4
      %p137 = pnand %p135, %p136
      %p138 = pneg %p137
      // Predicated region
      $region25: #{discriminator_forward.3} parent=5 // pred_check
        _
      $region26: #{discriminator_forward.3} parent=5 // pred_check_branch
        %140 = sbr.rel (%p137) target = $region28
      $region27: #{discriminator_forward.3} parent=5 // pred_region
        %s141 = ssub.s32 %s10, 1
        %s142 = smul.u32 16, %s15
        %p143 = scmp.lt.s32.totalorder %s142, 47
        %s144 = scalar_select %p143, %s142, 47
        %s145 = smul.addr %s144, 8
        %s146 = scalar_lea.vmem %s0, %s145
        %p147 = pneg %p36
        %p148 = pneg %p33
        %p149 = pneg %p57
        %p150 = pneg %p54
        %p151 = pneg %p83
        %p152 = pneg %p80
        %s153 = sand.u32 %s70, 1
        %s154 = sand.u32 %s70, 1
        %s155 = smul.addr %s154, 16
        %s156 = scalar_lea.vmem [#allocation2], %s155
        %p157 = pneg %p104
        %p158 = pneg %p101
        %s159 = smul.u32 16, %s15
        %p160 = scmp.lt.s32.totalorder %s159, 47
        %s161 = scalar_select %p160, %s159, 47
        %s162 = smul.addr %s161, 8
        %s163 = scalar_lea.vmem %s0, %s162
        %s164 = smul.u32 16, %s15
        %v165 = vld [vmem:[%s163] sm:$0xff]
        %v166 = vld [vmem:[%s163 + $0x8] sm:$0xff]
        %v167 = vld [vmem:[%s163 + $0x10] sm:$0xff]
        %v168 = vld [vmem:[%s163 + $0x18] sm:$0xff]
        %v169 = vld [vmem:[%s163 + $0x20] sm:$0xff]
        %v170 = vld [vmem:[%s163 + $0x28] sm:$0xff]
        %v171 = vld [vmem:[%s163 + $0x30] sm:$0xff]
        %v172 = vld [vmem:[%s163 + $0x38] sm:$0xff]
        %v173 = vld [vmem:[%s163 + $0x40] sm:$0xff]
        %v174 = vld [vmem:[%s163 + $0x48] sm:$0xff]
        %v175 = vld [vmem:[%s163 + $0x50] sm:$0xff]
        %v176 = vld [vmem:[%s163 + $0x58] sm:$0xff]
        %v177 = vld [vmem:[%s163 + $0x60] sm:$0xff]
        %v178 = vld [vmem:[%s163 + $0x68] sm:$0xff]
        %v179 = vld [vmem:[%s163 + $0x70] sm:$0xff]
        %v180 = vld [vmem:[%s163 + $0x78] sm:$0xff]
        %v181 = vld [vmem:[%s1] sm:$0xff]
        %v182 = vld [vmem:[%s1 + $0x8] sm:$0xff]
        %184 = vset.pattern.permute.xlu0 44
        %185 = vperm.xlu0 %184, %v181
        %v186 = vpop.permute.xlu0 %185
        %189 = vset.pattern.permute.xlu0 44
        %190 = vperm.xlu0 %189, %v182
        %v191 = vpop.permute.xlu0 %190
        %vm193 = vcmask 359424
        %v194 = vsel %vm193, %v181, 0
        %v196 = vsel %vm193, %v182, 0
        %v199 = vsel %vm193, %v165, 0
        %v202 = vsel %vm193, %v166, 0
        %v205 = vsel %vm193, %v167, 0
        %v208 = vsel %vm193, %v168, 0
        %v211 = vsel %vm193, %v169, 0
        %v214 = vsel %vm193, %v170, 0
        %v217 = vsel %vm193, %v171, 0
        %v220 = vsel %vm193, %v172, 0
        %v223 = vsel %vm193, %v173, 0
        %v226 = vsel %vm193, %v174, 0
        %v229 = vsel %vm193, %v175, 0
        %v232 = vsel %vm193, %v176, 0
        %v235 = vsel %vm193, %v177, 0
        %v238 = vsel %vm193, %v178, 0
        %v241 = vsel %vm193, %v179, 0
        %v244 = vsel %vm193, %v180, 0
        %246 = vmatprep.subr.mxu0 0.0
        %247 = vmatpush1.xpose.msra.mxu0 %v244
        %248 = vmatprep.subr.mxu0 0.0
        %249 = vmatpush1.xpose.msra.mxu0 %v241
        %250 = vmatprep.subr.mxu0 0.0
        %251 = vmatpush1.xpose.msra.mxu0 %v238
        %252 = vmatprep.subr.mxu0 0.0
        %253 = vmatpush1.xpose.msra.mxu0 %v235
        %254 = vmatprep.subr.mxu0 0.0
        %255 = vmatpush1.xpose.msra.mxu0 %v232
        %256 = vmatprep.subr.mxu0 0.0
        %257 = vmatpush1.xpose.msra.mxu0 %v229
        %258 = vmatprep.subr.mxu0 0.0
        %259 = vmatpush1.xpose.msra.mxu0 %v226
        %260 = vmatprep.subr.mxu0 0.0
        %261 = vmatpush1.xpose.msra.mxu0 %v223
        %262 = vmatprep.subr.mxu0 0.0
        %263 = vmatpush1.xpose.msra.mxu0 %v220
        %264 = vmatprep.subr.mxu0 0.0
        %265 = vmatpush1.xpose.msra.mxu0 %v217
        %266 = vmatprep.subr.mxu0 0.0
        %267 = vmatpush1.xpose.msra.mxu0 %v214
        %268 = vmatprep.subr.mxu0 0.0
        %269 = vmatpush1.xpose.msra.mxu0 %v211
        %270 = vmatprep.subr.mxu0 0.0
        %271 = vmatpush1.xpose.msra.mxu0 %v208
        %272 = vmatprep.subr.mxu0 0.0
        %273 = vmatpush1.xpose.msra.mxu0 %v205
        %274 = vmatprep.subr.mxu0 0.0
        %275 = vmatpush1.xpose.msra.mxu0 %v202
        %276 = vmatprep.subr.mxu0 0.0
        %277 = vmatpush1.xpose.msra.mxu0 %v199
        %278 = vmatprep.subr.mxu0 0.0
        %279 = vmatpush2.xpose.msra.mxu0 0.0
        %280 = vmatprep.subr.mxu0 0.0
        %281 = vmatpush2.xpose.msra.mxu0 0.0
        %282 = vmatprep.subr.mxu0 0.0
        %283 = vmatpush2.xpose.msra.mxu0 0.0
        %284 = vmatprep.subr.mxu0 0.0
        %285 = vmatpush2.xpose.msra.mxu0 0.0
        %286 = vmatprep.subr.mxu0 0.0
        %287 = vmatpush2.xpose.msra.mxu0 0.0
        %288 = vmatprep.subr.mxu0 0.0
        %289 = vmatpush2.xpose.msra.mxu0 0.0
        %290 = vmatprep.subr.mxu0 0.0
        %291 = vmatpush2.xpose.msra.mxu0 0.0
        %292 = vmatprep.subr.mxu0 0.0
        %293 = vmatpush2.xpose.msra.mxu0 0.0
        %294 = vmatprep.subr.mxu0 0.0
        %295 = vmatpush2.xpose.msra.mxu0 0.0
        %296 = vmatprep.subr.mxu0 0.0
        %297 = vmatpush2.xpose.msra.mxu0 0.0
        %298 = vmatprep.subr.mxu0 0.0
        %299 = vmatpush2.xpose.msra.mxu0 0.0
        %300 = vmatprep.subr.mxu0 0.0
        %301 = vmatpush2.xpose.msra.mxu0 0.0
        %302 = vmatprep.subr.mxu0 0.0
        %303 = vmatpush2.xpose.msra.mxu0 0.0
        %304 = vmatprep.subr.mxu0 0.0
        %305 = vmatpush2.xpose.msra.mxu0 0.0
        %306 = vmatprep.subr.mxu0 0.0
        %307 = vmatpush2.xpose.msra.mxu0 0.0
        %308 = vmatprep.subr.mxu0 0.0
        %309 = vmatpush2.xpose.msra.mxu0 0.0
        %310 = vmatprep.mubr.f32.mxu0 0.0
        %311 = vmatmul.mubr.f32.gmra.mxu0 %v194
        %v312 = vpop.f32.mrf.mxu0
        %v313 = vadd.f32 %v186, %v312
        %v314 = vpop.f32.mrf.mxu0
        %315 = vmatprep.mubr.f32.mxu0 0.0
        %316 = vmatmul.mubr.f32.gmra.mxu0 %v196
        %v317 = vpop.f32.mrf.mxu0
        %v318 = vadd.f32 %v191, %v317
        %v319 = vpop.f32.mrf.mxu0
        %320 = vdwg.mxu0
        %v321 = vmax.f32 %v313, 0.0
        %v322 = vmax.f32 %v318, 0.0
        %323 = vst [vmem:[%s156] sm:$0xff] %v321
        %324 = vst [vmem:[%s156 + $0x8] sm:$0xff] %v322
        %p325 = scmp.eq.s32.totalorder %s15, 0
        // Predicated region
        $region29: #{discriminator_forward.3} parent=27 // pred_check
          %p326 = pneg %p325
        $region30: #{discriminator_forward.3} parent=27 // pred_check_branch
          %328 = sbr.rel (%p326) target = $region32
        $region31: #{discriminator_forward.3} parent=27 // pred_region
          %vm329 = vcmask 15360
          %330 = vst.msk [vmem:[%s3] sm:$0xff] %vm329, 0.0
          %331 = vst.msk [vmem:[%s3 + $0x8] sm:$0xff] %vm329, 0.0
        $region32: #{discriminator_forward.3} parent=27 // pred_fallthru
          _
        %s332 = smul.u32 %s15, 128
        %v333 = vlaneseq
        %v334 = vand.u32 %v333, 127
        %v335 = vstv %s332
        %v336 = vadd.s32 %v335, %v334
        %vm337 = vcmp.lt.s32.totalorder %v336, 300
        %v338 = vsel %vm337, %v321, 0.0
        %v339 = vsel %vm337, %v322, 0.0
        %v340 = vld [vmem:[%s3] sm:$0xff]
        %v341 = vld [vmem:[%s3 + $0x8] sm:$0xff]
        %342 = vadd.xlane.f32.xlu0 %v338
        %v343 = vpop.xlane.xlu0 %342
        %344 = vadd.xlane.f32.xlu0 %v339
        %v345 = vpop.xlane.xlu0 %344
        %v346 = vadd.f32 %v340, %v343
        %v347 = vadd.f32 %v341, %v345
        %vm348 = vcmask 7168
        %349 = vst.msk [vmem:[%s3] sm:$0xff] %vm348, %v346
        %350 = vst.msk [vmem:[%s3 + $0x8] sm:$0xff] %vm348, %v347
        %v351 = vld [vmem:[%s3] sm:$0xff]
        %v352 = vld [vmem:[%s3 + $0x8] sm:$0xff]
        %v353 = vmul.f32 %v338, %v338
        %v354 = vmul.f32 %v339, %v339
        %355 = vadd.xlane.f32.xlu0 %v353
        %v356 = vpop.xlane.xlu0 %355
        %357 = vadd.xlane.f32.xlu0 %v354
        %v358 = vpop.xlane.xlu0 %357
        %v359 = vadd.f32 %v351, %v356
        %v360 = vadd.f32 %v352, %v358
        %vm361 = vcmask 15368
        %362 = vst.msk [vmem:[%s3] sm:$0xff] %vm361, %v359
        %363 = vst.msk [vmem:[%s3 + $0x8] sm:$0xff] %vm361, %v360
        %s364 = sand.u32 %s70, 1
        %s365 = sand.u32 %s70, 1
        %s366 = smul.addr %s365, 16
        %s367 = scalar_lea.vmem [#allocation2], %s366
        // Predicated region
        $region33: #{discriminator_forward.3} parent=27 // pred_check
          %p368 = pneg %p80
        $region34: #{discriminator_forward.3} parent=27 // pred_check_branch
          %370 = sbr.rel (%p368) target = $region36
        $region35: #{discriminator_forward.3} parent=27 // pred_region
          %s371 = smul.addr %s15, 8
          %s372 = scalar_lea.vmem %s2, %s371
          // Predicated region
          $region37: #{discriminator_forward.3} parent=35 // pred_check
            _
          $region38: #{discriminator_forward.3} parent=35 // pred_check_branch
            %374 = sbr.rel (0) target = $region40
          $region39: #{discriminator_forward.3} parent=35 // pred_region
            // Predicated region
            $region41: #{discriminator_forward.3} parent=39 // pred_check
              _
            $region42: #{discriminator_forward.3} parent=39 // pred_check_branch
              %376 = sbr.rel (0) target = $region44
            $region43: #{discriminator_forward.3} parent=39 // pred_region
              // Predicated region
              $region56: #{discriminator_forward.3} parent=43 // pred_check
                _
              $region57: #{discriminator_forward.3} parent=43 // pred_check_branch
                %394 = sbr.rel (0) target = $region59
              $region58: #{discriminator_forward.3} parent=43 // pred_region
                loop: start=0, step=1, limit=1
                $region60: #{discriminator_forward.3} parent=58 // loop_pre_header
                  _
                $region61: #{discriminator_forward.3} parent=58 // loop_header
                  %s396 = sphi 0, %s400
                  %p397 = scmp.ge.s32.totalorder %s396, 1
                  %s401 = sphi %s367, %s367
                  %s402 = sphi %s372, %s372
                $region62: #{discriminator_forward.3} parent=58 // loop_header_branch
                  %399 = sbr.rel (%p397) target = $region66
                $region63: #{discriminator_forward.3} parent=58 // loop_body
                  %v403 = vld [vmem:[%s401] sm:$0xff]
                  %404 = vst [vmem:[%s402] sm:$0xff] %v403
                  %v405 = vld [vmem:[%s401 + $0x8] sm:$0xff]
                  %406 = vst [vmem:[%s402 + $0x18] sm:$0xff] %v405
                $region64: #{discriminator_forward.3} parent=58 // loop_footer
                  %s400 = sadd.s32 1, %s396
                $region65: #{discriminator_forward.3} parent=58 // loop_footer_branch
                  %395 = sbr.rel target = $region61
                $region66: #{discriminator_forward.3} parent=58 // loop_exit
                  _
              $region59: #{discriminator_forward.3} parent=43 // pred_fallthru
                _
              // Predicated region
              $region67: #{discriminator_forward.3} parent=43 // pred_check
                _
              $region68: #{discriminator_forward.3} parent=43 // pred_check_branch
                %408 = sbr.rel target = $region70
              $region69: #{discriminator_forward.3} parent=43 // pred_region
                _
              $region70: #{discriminator_forward.3} parent=43 // pred_fallthru
                _
            $region44: #{discriminator_forward.3} parent=39 // pred_fallthru
              _
            // Predicated region
            $region45: #{discriminator_forward.3} parent=39 // pred_check
              _
            $region46: #{discriminator_forward.3} parent=39 // pred_check_branch
              %378 = sbr.rel target = $region48
            $region47: #{discriminator_forward.3} parent=39 // pred_region
              %s380 = ssub.s32 256, 1
              loop: start=0, step=1, limit=1
              $region49: #{discriminator_forward.3} parent=47 // loop_pre_header
                _
              $region50: #{discriminator_forward.3} parent=47 // loop_header
                %s382 = sphi 0, %s386
                %p383 = scmp.ge.s32.totalorder %s382, 1
                %s387 = sphi %s367, %s367
                %s388 = sphi %s372, %s372
              $region51: #{discriminator_forward.3} parent=47 // loop_header_branch
                %385 = sbr.rel (%p383) target = $region55
              $region52: #{discriminator_forward.3} parent=47 // loop_body
                %v389 = vld [vmem:[%s387] sm:%s380]
                %390 = vst [vmem:[%s388] sm:%s380] %v389
                %v391 = vld [vmem:[%s387 + $0x8] sm:%s380]
                %392 = vst [vmem:[%s388 + $0x18] sm:%s380] %v391
              $region53: #{discriminator_forward.3} parent=47 // loop_footer
                %s386 = sadd.s32 1, %s382
              $region54: #{discriminator_forward.3} parent=47 // loop_footer_branch
                %381 = sbr.rel target = $region50
              $region55: #{discriminator_forward.3} parent=47 // loop_exit
                _
            $region48: #{discriminator_forward.3} parent=39 // pred_fallthru
              _
          $region40: #{discriminator_forward.3} parent=35 // pred_fallthru
            _
          %409 = vnop
        $region36: #{discriminator_forward.3} parent=27 // pred_fallthru
          _
        // Predicated region
        $region71: #{discriminator_forward.3} parent=27 // pred_check
          %p410 = pneg %p101
        $region72: #{discriminator_forward.3} parent=27 // pred_check_branch
          %412 = sbr.rel (%p410) target = $region74
        $region73: #{discriminator_forward.3} parent=27 // pred_region
          _
        $region74: #{discriminator_forward.3} parent=27 // pred_fallthru
          _
        // Predicated region
        $region75: #{discriminator_forward.3} parent=27 // pred_check
          %p413 = pneg %p101
        $region76: #{discriminator_forward.3} parent=27 // pred_check_branch
          %415 = sbr.rel (%p413) target = $region78
        $region77: #{discriminator_forward.3} parent=27 // pred_region
          _
        $region78: #{discriminator_forward.3} parent=27 // pred_fallthru
          _
      $region28: #{discriminator_forward.3} parent=5 // pred_fallthru
        _
      %p416 = scmp.le.s32.totalorder 2, %s10
      // Predicated region
      $region79: #{discriminator_forward.3} parent=5 // pred_check
        %p417 = pneg %p416
      $region80: #{discriminator_forward.3} parent=5 // pred_check_branch
        %419 = sbr.rel (%p417) target = $region82
      $region81: #{discriminator_forward.3} parent=5 // pred_region
        %s420 = ssub.s32 %s10, 2
        // Predicated region
        $region83: #{discriminator_forward.3} parent=81 // pred_check
          %p421 = pneg %p86
        $region84: #{discriminator_forward.3} parent=81 // pred_check_branch
          %423 = sbr.rel (%p421) target = $region86
        $region85: #{discriminator_forward.3} parent=81 // pred_region
          %s424 = sand.u32 %s71, 1
          %s425 = sand.u32 %s71, 1
          %s426 = smul.addr %s425, 16
          %s427 = scalar_lea.vmem [#allocation2], %s426
        $region86: #{discriminator_forward.3} parent=81 // pred_fallthru
          _
      $region82: #{discriminator_forward.3} parent=5 // pred_fallthru
        _
    $region6: #{discriminator_forward.3} parent=1 // loop_footer
      %s14 = sadd.s32 1, %s10
    $region7: #{discriminator_forward.3} parent=1 // loop_footer_branch
      %9 = sbr.rel target = $region3
    $region8: #{discriminator_forward.3} parent=1 // loop_exit
      _

// kernel: discriminator_forward.5
$region0: #{discriminator_forward.5}
  #allocation0 [shape = 'u32[]', space=smem, size = 0x4, offset = 0x4, fixed_abs, tag = 'smem constant byte address 0x4 - core index']
  #allocation1 [shape = 'u32[144,128]{1,0:T(1,128)}', space=vmem, size = 0x12000, scoped, tag = 'internal scratch']
  %s0 = inlined_call_operand.vmem [shape: f32[16,384], index: 0, kind: input, shape index: {}]
  %s1 = inlined_call_operand.vmem [shape: f32[16,19], index: 1, kind: input, shape index: {}]
  %s2 = inlined_call_operand.vmem [shape: f32[1,384], index: 2, kind: output, shape index: {}]
  %s3 = sld [smem:[#allocation0]]
  $region79: #{discriminator_forward.5} parent=0
    _
  %s5 = ssub.s32 1, %s3
  %s6 = scalar_select 0, %s5, %s3
  $region1: #{discriminator_forward.5} parent=0
    #allocation2 [shape = 'u8[16384]{0}', space=vmem, size = 0x4000, scoped, tag = 'input window, operand 0']
    loop: start=0, step=1, limit=5
    $region2: #{discriminator_forward.5} parent=1 // loop_pre_header
      _
    $region3: #{discriminator_forward.5} parent=1 // loop_header
      %s8 = sphi 0, %s12
      %p9 = scmp.ge.s32.totalorder %s8, 5
      %s18 = sphi 0, %s20
      %s21 = sphi 0, %s18
      %s22 = sphi 0, %s21
      %s38 = sphi 0, %s22
      %s42 = sphi 0, %s42
      %s44 = sphi 0, %s42
      %s45 = sphi 0, %s44
      %s59 = sphi 0, %s45
      %s65 = sphi 0, %s67
      %s68 = sphi 0, %s65
      %s69 = sphi 0, %s68
      %s85 = sphi 0, %s69
    $region4: #{discriminator_forward.5} parent=1 // loop_header_branch
      %11 = sbr.rel (%p9) target = $region8
    $region5: #{discriminator_forward.5} parent=1 // loop_body
      %s13 = ssub.s32 %s8, 1
      %s14 = ssub.s32 %s8, 2
      %s15 = sadd.s32 %s8, 1
      %s16 = ssub.s32 %s8, %s15
      %p17 = scmp.eq.s32.totalorder %s16, 0
      %s19 = sadd.s32 %s18, 1
      %s20 = scalar_select %p17, %s18, %s19
      %p23 = pneg %p17
      %p24 = scmp.eq.s32.totalorder %s8, 2
      %p25 = por %p23, %p24
      %p26 = scmp.ne.s32.totalorder %s18, %s21
      %p27 = scmp.eq.s32.totalorder %s8, 0
      %p28 = por %p26, %p27
      %p29 = scmp.ne.s32.totalorder %s18, %s21
      %p30 = scmp.eq.s32.totalorder %s13, 2
      %p31 = por %p29, %p30
      %p32 = scmp.ne.s32.totalorder %s21, %s22
      %p33 = scmp.eq.s32.totalorder %s13, 0
      %p34 = por %p32, %p33
      %p35 = scmp.ne.s32.totalorder %s21, %s22
      %p36 = scmp.eq.s32.totalorder %s14, 2
      %p37 = por %p35, %p36
      %p39 = scmp.ne.s32.totalorder %s22, %s38
      %p40 = scmp.eq.s32.totalorder %s14, 0
      %p41 = por %p39, %p40
      %s43 = sadd.s32 %s42, 1
      %p46 = scmp.eq.s32.totalorder %s8, 2
      %p47 = scmp.ne.s32.totalorder %s42, %s44
      %p48 = scmp.eq.s32.totalorder %s8, 0
      %p49 = por %p47, %p48
      %p50 = scmp.ne.s32.totalorder %s42, %s44
      %p51 = scmp.eq.s32.totalorder %s13, 2
      %p52 = por %p50, %p51
      %p53 = scmp.ne.s32.totalorder %s44, %s45
      %p54 = scmp.eq.s32.totalorder %s13, 0
      %p55 = por %p53, %p54
      %p56 = scmp.ne.s32.totalorder %s44, %s45
      %p57 = scmp.eq.s32.totalorder %s14, 2
      %p58 = por %p56, %p57
      %p60 = scmp.ne.s32.totalorder %s45, %s59
      %p61 = scmp.eq.s32.totalorder %s14, 0
      %p62 = por %p60, %p61
      %s63 = ssub.s32 %s8, %s15
      %p64 = scmp.eq.s32.totalorder %s63, 0
      %s66 = sadd.s32 %s65, 1
      %s67 = scalar_select %p64, %s65, %s66
      %p70 = pneg %p64
      %p71 = scmp.eq.s32.totalorder %s8, 2
      %p72 = por %p70, %p71
      %p73 = scmp.ne.s32.totalorder %s65, %s68
      %p74 = scmp.eq.s32.totalorder %s8, 0
      %p75 = por %p73, %p74
      %p76 = scmp.ne.s32.totalorder %s65, %s68
      %p77 = scmp.eq.s32.totalorder %s13, 2
      %p78 = por %p76, %p77
      %p79 = scmp.ne.s32.totalorder %s68, %s69
      %p80 = scmp.eq.s32.totalorder %s13, 0
      %p81 = por %p79, %p80
      %p82 = scmp.ne.s32.totalorder %s68, %s69
      %p83 = scmp.eq.s32.totalorder %s14, 2
      %p84 = por %p82, %p83
      %p86 = scmp.ne.s32.totalorder %s69, %s85
      %p87 = scmp.eq.s32.totalorder %s14, 0
      %p88 = por %p86, %p87
      %p89 = scmp.le.s32.totalorder 1, %s8
      %p90 = scmp.lt.s32.totalorder %s8, 4
      %p91 = pnand %p89, %p90
      %p92 = pneg %p91
      // Predicated region
      $region9: #{discriminator_forward.5} parent=5 // pred_check
        _
      $region10: #{discriminator_forward.5} parent=5 // pred_check_branch
        %94 = sbr.rel (%p91) target = $region12
      $region11: #{discriminator_forward.5} parent=5 // pred_region
        %s95 = ssub.s32 %s8, 1
        // Predicated region
        $region13: #{discriminator_forward.5} parent=11 // pred_check
          %p96 = pneg %p55
        $region14: #{discriminator_forward.5} parent=11 // pred_check_branch
          %98 = sbr.rel (%p96) target = $region16
        $region15: #{discriminator_forward.5} parent=11 // pred_region
          _
        $region16: #{discriminator_forward.5} parent=11 // pred_fallthru
          _
      $region12: #{discriminator_forward.5} parent=5 // pred_fallthru
        _
      %p99 = scmp.lt.s32.totalorder %s8, 3
      // Predicated region
      $region17: #{discriminator_forward.5} parent=5 // pred_check
        %p100 = pneg %p99
      $region18: #{discriminator_forward.5} parent=5 // pred_check_branch
        %102 = sbr.rel (%p100) target = $region20
      $region19: #{discriminator_forward.5} parent=5 // pred_region
        // Predicated region
        $region21: #{discriminator_forward.5} parent=19 // pred_check
          %p103 = pneg %p28
        $region22: #{discriminator_forward.5} parent=19 // pred_check_branch
          %105 = sbr.rel (%p103) target = $region24
        $region23: #{discriminator_forward.5} parent=19 // pred_region
          %s106 = sand.u32 %s18, 1
          %s107 = sand.u32 %s18, 1
          %s108 = smul.addr %s107, 16
          %s109 = scalar_lea.vmem [#allocation2], %s108
          %s110 = smul.addr %s8, 8
          %s111 = scalar_lea.vmem %s0, %s110
          // Predicated region
          $region25: #{discriminator_forward.5} parent=23 // pred_check
            _
          $region26: #{discriminator_forward.5} parent=23 // pred_check_branch
            %113 = sbr.rel (0) target = $region28
          $region27: #{discriminator_forward.5} parent=23 // pred_region
            // Predicated region
            $region29: #{discriminator_forward.5} parent=27 // pred_check
              _
            $region30: #{discriminator_forward.5} parent=27 // pred_check_branch
              %115 = sbr.rel (0) target = $region32
            $region31: #{discriminator_forward.5} parent=27 // pred_region
              // Predicated region
              $region44: #{discriminator_forward.5} parent=31 // pred_check
                _
              $region45: #{discriminator_forward.5} parent=31 // pred_check_branch
                %133 = sbr.rel (0) target = $region47
              $region46: #{discriminator_forward.5} parent=31 // pred_region
                loop: start=0, step=1, limit=1
                $region48: #{discriminator_forward.5} parent=46 // loop_pre_header
                  _
                $region49: #{discriminator_forward.5} parent=46 // loop_header
                  %s135 = sphi 0, %s139
                  %p136 = scmp.ge.s32.totalorder %s135, 1
                  %s140 = sphi %s111, %s111
                  %s141 = sphi %s109, %s109
                $region50: #{discriminator_forward.5} parent=46 // loop_header_branch
                  %138 = sbr.rel (%p136) target = $region54
                $region51: #{discriminator_forward.5} parent=46 // loop_body
                  %v142 = vld [vmem:[%s140] sm:$0xff]
                  %143 = vst [vmem:[%s141] sm:$0xff] %v142
                  %v144 = vld [vmem:[%s140 + $0x18] sm:$0xff]
                  %145 = vst [vmem:[%s141 + $0x8] sm:$0xff] %v144
                $region52: #{discriminator_forward.5} parent=46 // loop_footer
                  %s139 = sadd.s32 1, %s135
                $region53: #{discriminator_forward.5} parent=46 // loop_footer_branch
                  %134 = sbr.rel target = $region49
                $region54: #{discriminator_forward.5} parent=46 // loop_exit
                  _
              $region47: #{discriminator_forward.5} parent=31 // pred_fallthru
                _
              // Predicated region
              $region55: #{discriminator_forward.5} parent=31 // pred_check
                _
              $region56: #{discriminator_forward.5} parent=31 // pred_check_branch
                %147 = sbr.rel target = $region58
              $region57: #{discriminator_forward.5} parent=31 // pred_region
                _
              $region58: #{discriminator_forward.5} parent=31 // pred_fallthru
                _
            $region32: #{discriminator_forward.5} parent=27 // pred_fallthru
              _
            // Predicated region
            $region33: #{discriminator_forward.5} parent=27 // pred_check
              _
            $region34: #{discriminator_forward.5} parent=27 // pred_check_branch
              %117 = sbr.rel target = $region36
            $region35: #{discriminator_forward.5} parent=27 // pred_region
              %s119 = ssub.s32 256, 1
              loop: start=0, step=1, limit=1
              $region37: #{discriminator_forward.5} parent=35 // loop_pre_header
                _
              $region38: #{discriminator_forward.5} parent=35 // loop_header
                %s121 = sphi 0, %s125
                %p122 = scmp.ge.s32.totalorder %s121, 1
                %s126 = sphi %s111, %s111
                %s127 = sphi %s109, %s109
              $region39: #{discriminator_forward.5} parent=35 // loop_header_branch
                %124 = sbr.rel (%p122) target = $region43
              $region40: #{discriminator_forward.5} parent=35 // loop_body
                %v128 = vld [vmem:[%s126] sm:%s119]
                %129 = vst [vmem:[%s127] sm:%s119] %v128
                %v130 = vld [vmem:[%s126 + $0x18] sm:%s119]
                %131 = vst [vmem:[%s127 + $0x8] sm:%s119] %v130
              $region41: #{discriminator_forward.5} parent=35 // loop_footer
                %s125 = sadd.s32 1, %s121
              $region42: #{discriminator_forward.5} parent=35 // loop_footer_branch
                %120 = sbr.rel target = $region38
              $region43: #{discriminator_forward.5} parent=35 // loop_exit
                _
            $region36: #{discriminator_forward.5} parent=27 // pred_fallthru
              _
          $region28: #{discriminator_forward.5} parent=23 // pred_fallthru
            _
          %148 = vnop
        $region24: #{discriminator_forward.5} parent=19 // pred_fallthru
          _
      $region20: #{discriminator_forward.5} parent=5 // pred_fallthru
        _
      %p149 = scmp.le.s32.totalorder 1, %s8
      %p150 = scmp.lt.s32.totalorder %s8, 4
      %p151 = pnand %p149, %p150
      %p152 = pneg %p151
      // Predicated region
      $region59: #{discriminator_forward.5} parent=5 // pred_check
        _
      $region60: #{discriminator_forward.5} parent=5 // pred_check_branch
        %154 = sbr.rel (%p151) target = $region62
      $region61: #{discriminator_forward.5} parent=5 // pred_region
        %s155 = ssub.s32 %s8, 1
        %s156 = sand.u32 %s21, 1
        %s157 = sand.u32 %s21, 1
        %s158 = smul.addr %s157, 16
        %s159 = scalar_lea.vmem [#allocation2], %s158
        // Predicated region
        $region63: #{discriminator_forward.5} parent=61 // pred_check
          %p160 = pneg %p34
        $region64: #{discriminator_forward.5} parent=61 // pred_check_branch
          %162 = sbr.rel (%p160) target = $region66
        $region65: #{discriminator_forward.5} parent=61 // pred_region
          _
        $region66: #{discriminator_forward.5} parent=61 // pred_fallthru
          _
        %s163 = sand.u32 %s21, 1
        %s164 = sand.u32 %s21, 1
        %s165 = smul.addr %s164, 16
        %s166 = scalar_lea.vmem [#allocation2], %s165
        %p167 = pneg %p34
        %p168 = pneg %p31
        %p169 = pneg %p55
        %p170 = pneg %p52
        %p171 = pneg %p81
        %p172 = pneg %p78
        %p173 = scmp.lt.s32.totalorder %s13, 2
        %s174 = scalar_select %p173, %s13, 2
        %s175 = scalar_lea.vmem %s2, %s174
        %p176 = scmp.lt.s32.totalorder %s13, 2
        %s177 = scalar_select %p176, %s13, 2
        %s178 = scalar_lea.vmem %s2, %s177
        %v179 = vld [vmem:[%s159] sm:$0xff]
        %v180 = vld [vmem:[%s159 + $0x8] sm:$0xff]
        %v181 = vld [vmem:[%s1] sm:$0xff]
        %v182 = vld [vmem:[%s1 + $0x8] sm:$0xff]
        %v183 = vld [vmem:[%s1] sm:$0x1]
        %185 = vset.pattern.permute.xlu0 16
        %186 = vperm.xlu0 %185, %v181
        %v187 = vpop.permute.xlu0 %186
        %190 = vset.pattern.permute.xlu0 16
        %191 = vperm.xlu0 %190, %v182
        %v192 = vpop.permute.xlu0 %191
        %vm194 = vcmask 130048
        %v195 = vsel %vm194, %v181, 0
        %v197 = vsel %vm194, %v182, 0
        %199 = vmatprep.subr.mxu0 0.0
        %200 = vmatpush1.msra.mxu0 0.0
        %201 = vmatprep.subr.mxu0 0.0
        %202 = vmatpush1.msra.mxu0 0.0
        %203 = vmatprep.subr.mxu0 0.0
        %204 = vmatpush1.msra.mxu0 0.0
        %205 = vmatprep.subr.mxu0 0.0
        %206 = vmatpush1.msra.mxu0 0.0
        %207 = vmatprep.subr.mxu0 0.0
        %208 = vmatpush1.msra.mxu0 0.0
        %209 = vmatprep.subr.mxu0 0.0
        %210 = vmatpush1.msra.mxu0 0.0
        %211 = vmatprep.subr.mxu0 0.0
        %212 = vmatpush1.msra.mxu0 0.0
        %213 = vmatprep.subr.mxu0 0.0
        %214 = vmatpush1.msra.mxu0 0.0
        %215 = vmatprep.subr.mxu0 0.0
        %216 = vmatpush1.msra.mxu0 0.0
        %217 = vmatprep.subr.mxu0 0.0
        %218 = vmatpush1.msra.mxu0 0.0
        %219 = vmatprep.subr.mxu0 0.0
        %220 = vmatpush1.msra.mxu0 0.0
        %221 = vmatprep.subr.mxu0 0.0
        %222 = vmatpush1.msra.mxu0 0.0
        %223 = vmatprep.subr.mxu0 0.0
        %224 = vmatpush1.msra.mxu0 0.0
        %225 = vmatprep.subr.mxu0 0.0
        %226 = vmatpush1.msra.mxu0 0.0
        %227 = vmatprep.subr.mxu0 0.0
        %228 = vmatpush1.msra.mxu0 %v180
        %229 = vmatprep.subr.mxu0 0.0
        %230 = vmatpush1.msra.mxu0 %v179
        %231 = vmatprep.subr.mxu0 0.0
        %232 = vmatpush2.msra.mxu0 0.0
        %233 = vmatprep.subr.mxu0 0.0
        %234 = vmatpush2.msra.mxu0 0.0
        %235 = vmatprep.subr.mxu0 0.0
        %236 = vmatpush2.msra.mxu0 0.0
        %237 = vmatprep.subr.mxu0 0.0
        %238 = vmatpush2.msra.mxu0 0.0
        %239 = vmatprep.subr.mxu0 0.0
        %240 = vmatpush2.msra.mxu0 0.0
        %241 = vmatprep.subr.mxu0 0.0
        %242 = vmatpush2.msra.mxu0 0.0
        %243 = vmatprep.subr.mxu0 0.0
        %244 = vmatpush2.msra.mxu0 0.0
        %245 = vmatprep.subr.mxu0 0.0
        %246 = vmatpush2.msra.mxu0 0.0
        %247 = vmatprep.subr.mxu0 0.0
        %248 = vmatpush2.msra.mxu0 0.0
        %249 = vmatprep.subr.mxu0 0.0
        %250 = vmatpush2.msra.mxu0 0.0
        %251 = vmatprep.subr.mxu0 0.0
        %252 = vmatpush2.msra.mxu0 0.0
        %253 = vmatprep.subr.mxu0 0.0
        %254 = vmatpush2.msra.mxu0 0.0
        %255 = vmatprep.subr.mxu0 0.0
        %256 = vmatpush2.msra.mxu0 0.0
        %257 = vmatprep.subr.mxu0 0.0
        %258 = vmatpush2.msra.mxu0 0.0
        %259 = vmatprep.subr.mxu0 0.0
        %260 = vmatpush2.msra.mxu0 0.0
        %261 = vmatprep.subr.mxu0 0.0
        %262 = vmatpush2.msra.mxu0 0.0
        %263 = vmatprep.mubr.f32.mxu0 0.0
        %264 = vmatmul.mubr.f32.gmra.mxu0 %v195
        %v265 = vpop.f32.mrf.mxu0
        %v266 = vadd.f32 %v187, %v265
        %v267 = vpop.f32.mrf.mxu0
        %268 = vmatprep.mubr.f32.mxu0 0.0
        %269 = vmatmul.mubr.f32.gmra.mxu0 %v197
        %v270 = vpop.f32.mrf.mxu0
        %v271 = vadd.f32 %v192, %v270
        %v272 = vpop.f32.mrf.mxu0
        %273 = vdwg.mxu0
        %v274 = vmax.f32 %v266, 0.0
        %v275 = vmax.f32 %v271, 0.0
        %276 = vset.pattern.permute.xlu0 17
        %277 = vperm.xlu0 %276, %v181
        %v278 = vpop.permute.xlu0 %277
        %280 = vset.pattern.permute.xlu0 17
        %281 = vperm.xlu0 %280, %v182
        %v282 = vpop.permute.xlu0 %281
        %v284 = vmul.f32 %v274, %v278
        %v285 = vmul.f32 %v275, %v282
        %v286 = vadd.f32 %v284, %v285
        %v287 = vrot.slane %v286, 4
        %v288 = vadd.f32 %v286, %v287
        %v289 = vrot.slane %v288, 2
        %v290 = vadd.f32 %v288, %v289
        %v291 = vrot.slane %v290, 1
        %v292 = vadd.f32 %v290, %v291
        %294 = vset.pattern.permute.xlu0 18
        %295 = vperm.xlu0 %294, %v183
        %v296 = vpop.permute.xlu0 %295
        %v298 = vadd.f32 %v292, %v296
        %299 = vst [vmem:[%s178] sm:$0x1] %v298
        %p300 = scmp.lt.s32.totalorder %s13, 2
        %s301 = scalar_select %p300, %s13, 2
        %s302 = scalar_lea.vmem %s2, %s301
        // Predicated region
        $region67: #{discriminator_forward.5} parent=61 // pred_check
          %p303 = pneg %p78
        $region68: #{discriminator_forward.5} parent=61 // pred_check_branch
          %305 = sbr.rel (%p303) target = $region70
        $region69: #{discriminator_forward.5} parent=61 // pred_region
          _
        $region70: #{discriminator_forward.5} parent=61 // pred_fallthru
          _
      $region62: #{discriminator_forward.5} parent=5 // pred_fallthru
        _
      %p306 = scmp.le.s32.totalorder 2, %s8
      // Predicated region
      $region71: #{discriminator_forward.5} parent=5 // pred_check
        %p307 = pneg %p306
      $region72: #{discriminator_forward.5} parent=5 // pred_check_branch
        %309 = sbr.rel (%p307) target = $region74
      $region73: #{discriminator_forward.5} parent=5 // pred_region
        %s310 = ssub.s32 %s8, 2
        // Predicated region
        $region75: #{discriminator_forward.5} parent=73 // pred_check
          %p311 = pneg %p84
        $region76: #{discriminator_forward.5} parent=73 // pred_check_branch
          %313 = sbr.rel (%p311) target = $region78
        $region77: #{discriminator_forward.5} parent=73 // pred_region
          %p314 = scmp.lt.s32.totalorder %s14, 2
          %s315 = scalar_select %p314, %s14, 2
          %s316 = scalar_lea.vmem %s2, %s315
        $region78: #{discriminator_forward.5} parent=73 // pred_fallthru
          _
      $region74: #{discriminator_forward.5} parent=5 // pred_fallthru
        _
    $region6: #{discriminator_forward.5} parent=1 // loop_footer
      %s12 = sadd.s32 1, %s8
    $region7: #{discriminator_forward.5} parent=1 // loop_footer_branch
      %7 = sbr.rel target = $region3
    $region8: #{discriminator_forward.5} parent=1 // loop_exit
      _

// kernel: discriminator_forward.4
$region0: #{discriminator_forward.4}
  #allocation0 [shape = 'u32[]', space=smem, size = 0x4, offset = 0x4, fixed_abs, tag = 'smem constant byte address 0x4 - core index']
  #allocation1 [shape = 'u32[144,128]{1,0:T(1,128)}', space=vmem, size = 0x12000, scoped, tag = 'internal scratch']
  %s0 = inlined_call_operand.vmem [shape: f32[16,384], index: 0, kind: input, shape index: {}]
  %s1 = inlined_call_operand.vmem [shape: f32[16,17], index: 1, kind: input, shape index: {}]
  %s2 = inlined_call_operand.vmem [shape: f32[16,2], index: 2, kind: output, shape index: {}]
  %s3 = sld [smem:[#allocation0]]
  $region83: #{discriminator_forward.4} parent=0
    _
  %s5 = ssub.s32 1, %s3
  %s6 = scalar_select 0, %s5, %s3
  $region1: #{discriminator_forward.4} parent=0
    #allocation2 [shape = 'u8[16384]{0}', space=vmem, size = 0x4000, scoped, tag = 'input window, operand 0']
    loop: start=0, step=1, limit=5
    $region2: #{discriminator_forward.4} parent=1 // loop_pre_header
      _
    $region3: #{discriminator_forward.4} parent=1 // loop_header
      %s8 = sphi 0, %s12
      %p9 = scmp.ge.s32.totalorder %s8, 5
      %s18 = sphi 0, %s20
      %s21 = sphi 0, %s18
      %s22 = sphi 0, %s21
      %s38 = sphi 0, %s22
      %s42 = sphi 0, %s42
      %s44 = sphi 0, %s42
      %s45 = sphi 0, %s44
      %s59 = sphi 0, %s45
      %s63 = sphi 0, %s63
      %s65 = sphi 0, %s63
      %s66 = sphi 0, %s65
      %s80 = sphi 0, %s66
    $region4: #{discriminator_forward.4} parent=1 // loop_header_branch
      %11 = sbr.rel (%p9) target = $region8
    $region5: #{discriminator_forward.4} parent=1 // loop_body
      %s13 = ssub.s32 %s8, 1
      %s14 = ssub.s32 %s8, 2
      %s15 = sadd.s32 %s8, 1
      %s16 = ssub.s32 %s8, %s15
      %p17 = scmp.eq.s32.totalorder %s16, 0
      %s19 = sadd.s32 %s18, 1
      %s20 = scalar_select %p17, %s18, %s19
      %p23 = pneg %p17
      %p24 = scmp.eq.s32.totalorder %s8, 2
      %p25 = por %p23, %p24
      %p26 = scmp.ne.s32.totalorder %s18, %s21
      %p27 = scmp.eq.s32.totalorder %s8, 0
      %p28 = por %p26, %p27
      %p29 = scmp.ne.s32.totalorder %s18, %s21
      %p30 = scmp.eq.s32.totalorder %s13, 2
      %p31 = por %p29, %p30
      %p32 = scmp.ne.s32.totalorder %s21, %s22
      %p33 = scmp.eq.s32.totalorder %s13, 0
      %p34 = por %p32, %p33
      %p35 = scmp.ne.s32.totalorder %s21, %s22
      %p36 = scmp.eq.s32.totalorder %s14, 2
      %p37 = por %p35, %p36
      %p39 = scmp.ne.s32.totalorder %s22, %s38
      %p40 = scmp.eq.s32.totalorder %s14, 0
      %p41 = por %p39, %p40
      %s43 = sadd.s32 %s42, 1
      %p46 = scmp.eq.s32.totalorder %s8, 2
      %p47 = scmp.ne.s32.totalorder %s42, %s44
      %p48 = scmp.eq.s32.totalorder %s8, 0
      %p49 = por %p47, %p48
      %p50 = scmp.ne.s32.totalorder %s42, %s44
      %p51 = scmp.eq.s32.totalorder %s13, 2
      %p52 = por %p50, %p51
      %p53 = scmp.ne.s32.totalorder %s44, %s45
      %p54 = scmp.eq.s32.totalorder %s13, 0
      %p55 = por %p53, %p54
      %p56 = scmp.ne.s32.totalorder %s44, %s45
      %p57 = scmp.eq.s32.totalorder %s14, 2
      %p58 = por %p56, %p57
      %p60 = scmp.ne.s32.totalorder %s45, %s59
      %p61 = scmp.eq.s32.totalorder %s14, 0
      %p62 = por %p60, %p61
      %s64 = sadd.s32 %s63, 1
      %p67 = scmp.eq.s32.totalorder %s8, 2
      %p68 = scmp.ne.s32.totalorder %s63, %s65
      %p69 = scmp.eq.s32.totalorder %s8, 0
      %p70 = por %p68, %p69
      %p71 = scmp.ne.s32.totalorder %s63, %s65
      %p72 = scmp.eq.s32.totalorder %s13, 2
      %p73 = por %p71, %p72
      %p74 = scmp.ne.s32.totalorder %s65, %s66
      %p75 = scmp.eq.s32.totalorder %s13, 0
      %p76 = por %p74, %p75
      %p77 = scmp.ne.s32.totalorder %s65, %s66
      %p78 = scmp.eq.s32.totalorder %s14, 2
      %p79 = por %p77, %p78
      %p81 = scmp.ne.s32.totalorder %s66, %s80
      %p82 = scmp.eq.s32.totalorder %s14, 0
      %p83 = por %p81, %p82
      %p84 = scmp.le.s32.totalorder 1, %s8
      %p85 = scmp.lt.s32.totalorder %s8, 4
      %p86 = pnand %p84, %p85
      %p87 = pneg %p86
      // Predicated region
      $region9: #{discriminator_forward.4} parent=5 // pred_check
        _
      $region10: #{discriminator_forward.4} parent=5 // pred_check_branch
        %89 = sbr.rel (%p86) target = $region12
      $region11: #{discriminator_forward.4} parent=5 // pred_region
        %s90 = ssub.s32 %s8, 1
        // Predicated region
        $region13: #{discriminator_forward.4} parent=11 // pred_check
          %p91 = pneg %p55
        $region14: #{discriminator_forward.4} parent=11 // pred_check_branch
          %93 = sbr.rel (%p91) target = $region16
        $region15: #{discriminator_forward.4} parent=11 // pred_region
          _
        $region16: #{discriminator_forward.4} parent=11 // pred_fallthru
          _
      $region12: #{discriminator_forward.4} parent=5 // pred_fallthru
        _
      %p94 = scmp.lt.s32.totalorder %s8, 3
      // Predicated region
      $region17: #{discriminator_forward.4} parent=5 // pred_check
        %p95 = pneg %p94
      $region18: #{discriminator_forward.4} parent=5 // pred_check_branch
        %97 = sbr.rel (%p95) target = $region20
      $region19: #{discriminator_forward.4} parent=5 // pred_region
        // Predicated region
        $region21: #{discriminator_forward.4} parent=19 // pred_check
          %p98 = pneg %p28
        $region22: #{discriminator_forward.4} parent=19 // pred_check_branch
          %100 = sbr.rel (%p98) target = $region24
        $region23: #{discriminator_forward.4} parent=19 // pred_region
          %s101 = sand.u32 %s18, 1
          %s102 = sand.u32 %s18, 1
          %s103 = smul.addr %s102, 16
          %s104 = scalar_lea.vmem [#allocation2], %s103
          %s105 = smul.addr %s8, 8
          %s106 = scalar_lea.vmem %s0, %s105
          // Predicated region
          $region25: #{discriminator_forward.4} parent=23 // pred_check
            _
          $region26: #{discriminator_forward.4} parent=23 // pred_check_branch
            %108 = sbr.rel (0) target = $region28
          $region27: #{discriminator_forward.4} parent=23 // pred_region
            // Predicated region
            $region29: #{discriminator_forward.4} parent=27 // pred_check
              _
            $region30: #{discriminator_forward.4} parent=27 // pred_check_branch
              %110 = sbr.rel (0) target = $region32
            $region31: #{discriminator_forward.4} parent=27 // pred_region
              // Predicated region
              $region44: #{discriminator_forward.4} parent=31 // pred_check
                _
              $region45: #{discriminator_forward.4} parent=31 // pred_check_branch
                %128 = sbr.rel (0) target = $region47
              $region46: #{discriminator_forward.4} parent=31 // pred_region
                loop: start=0, step=1, limit=1
                $region48: #{discriminator_forward.4} parent=46 // loop_pre_header
                  _
                $region49: #{discriminator_forward.4} parent=46 // loop_header
                  %s130 = sphi 0, %s134
                  %p131 = scmp.ge.s32.totalorder %s130, 1
                  %s135 = sphi %s106, %s106
                  %s136 = sphi %s104, %s104
                $region50: #{discriminator_forward.4} parent=46 // loop_header_branch
                  %133 = sbr.rel (%p131) target = $region54
                $region51: #{discriminator_forward.4} parent=46 // loop_body
                  %v137 = vld [vmem:[%s135] sm:$0xff]
                  %138 = vst [vmem:[%s136] sm:$0xff] %v137
                  %v139 = vld [vmem:[%s135 + $0x18] sm:$0xff]
                  %140 = vst [vmem:[%s136 + $0x8] sm:$0xff] %v139
                $region52: #{discriminator_forward.4} parent=46 // loop_footer
                  %s134 = sadd.s32 1, %s130
                $region53: #{discriminator_forward.4} parent=46 // loop_footer_branch
                  %129 = sbr.rel target = $region49
                $region54: #{discriminator_forward.4} parent=46 // loop_exit
                  _
              $region47: #{discriminator_forward.4} parent=31 // pred_fallthru
                _
              // Predicated region
              $region55: #{discriminator_forward.4} parent=31 // pred_check
                _
              $region56: #{discriminator_forward.4} parent=31 // pred_check_branch
                %142 = sbr.rel target = $region58
              $region57: #{discriminator_forward.4} parent=31 // pred_region
                _
              $region58: #{discriminator_forward.4} parent=31 // pred_fallthru
                _
            $region32: #{discriminator_forward.4} parent=27 // pred_fallthru
              _
            // Predicated region
            $region33: #{discriminator_forward.4} parent=27 // pred_check
              _
            $region34: #{discriminator_forward.4} parent=27 // pred_check_branch
              %112 = sbr.rel target = $region36
            $region35: #{discriminator_forward.4} parent=27 // pred_region
              %s114 = ssub.s32 256, 1
              loop: start=0, step=1, limit=1
              $region37: #{discriminator_forward.4} parent=35 // loop_pre_header
                _
              $region38: #{discriminator_forward.4} parent=35 // loop_header
                %s116 = sphi 0, %s120
                %p117 = scmp.ge.s32.totalorder %s116, 1
                %s121 = sphi %s106, %s106
                %s122 = sphi %s104, %s104
              $region39: #{discriminator_forward.4} parent=35 // loop_header_branch
                %119 = sbr.rel (%p117) target = $region43
              $region40: #{discriminator_forward.4} parent=35 // loop_body
                %v123 = vld [vmem:[%s121] sm:%s114]
                %124 = vst [vmem:[%s122] sm:%s114] %v123
                %v125 = vld [vmem:[%s121 + $0x18] sm:%s114]
                %126 = vst [vmem:[%s122 + $0x8] sm:%s114] %v125
              $region41: #{discriminator_forward.4} parent=35 // loop_footer
                %s120 = sadd.s32 1, %s116
              $region42: #{discriminator_forward.4} parent=35 // loop_footer_branch
                %115 = sbr.rel target = $region38
              $region43: #{discriminator_forward.4} parent=35 // loop_exit
                _
            $region36: #{discriminator_forward.4} parent=27 // pred_fallthru
              _
          $region28: #{discriminator_forward.4} parent=23 // pred_fallthru
            _
          %143 = vnop
        $region24: #{discriminator_forward.4} parent=19 // pred_fallthru
          _
      $region20: #{discriminator_forward.4} parent=5 // pred_fallthru
        _
      %p144 = scmp.le.s32.totalorder 1, %s8
      %p145 = scmp.lt.s32.totalorder %s8, 4
      %p146 = pnand %p144, %p145
      %p147 = pneg %p146
      // Predicated region
      $region59: #{discriminator_forward.4} parent=5 // pred_check
        _
      $region60: #{discriminator_forward.4} parent=5 // pred_check_branch
        %149 = sbr.rel (%p146) target = $region62
      $region61: #{discriminator_forward.4} parent=5 // pred_region
        %s150 = ssub.s32 %s8, 1
        %s151 = sand.u32 %s21, 1
        %s152 = sand.u32 %s21, 1
        %s153 = smul.addr %s152, 16
        %s154 = scalar_lea.vmem [#allocation2], %s153
        // Predicated region
        $region63: #{discriminator_forward.4} parent=61 // pred_check
          %p155 = pneg %p34
        $region64: #{discriminator_forward.4} parent=61 // pred_check_branch
          %157 = sbr.rel (%p155) target = $region66
        $region65: #{discriminator_forward.4} parent=61 // pred_region
          _
        $region66: #{discriminator_forward.4} parent=61 // pred_fallthru
          _
        %s158 = sand.u32 %s21, 1
        %s159 = sand.u32 %s21, 1
        %s160 = smul.addr %s159, 16
        %s161 = scalar_lea.vmem [#allocation2], %s160
        %p162 = pneg %p34
        %p163 = pneg %p31
        %p164 = pneg %p55
        %p165 = pneg %p52
        %p166 = pneg %p76
        %p167 = pneg %p73
        %v168 = vld [vmem:[%s154] sm:$0xff]
        %v169 = vld [vmem:[%s154 + $0x8] sm:$0xff]
        %v170 = vld [vmem:[%s1] sm:$0xff]
        %v171 = vld [vmem:[%s1 + $0x8] sm:$0xff]
        %173 = vset.pattern.permute.xlu0 16
        %174 = vperm.xlu0 %173, %v170
        %v175 = vpop.permute.xlu0 %174
        %178 = vset.pattern.permute.xlu0 16
        %179 = vperm.xlu0 %178, %v171
        %v180 = vpop.permute.xlu0 %179
        %vm182 = vcmask 130048
        %v183 = vsel %vm182, %v170, 0
        %v185 = vsel %vm182, %v171, 0
        %187 = vmatprep.subr.mxu0 0.0
        %188 = vmatpush1.msra.mxu0 0.0
        %189 = vmatprep.subr.mxu0 0.0
        %190 = vmatpush1.msra.mxu0 0.0
        %191 = vmatprep.subr.mxu0 0.0
        %192 = vmatpush1.msra.mxu0 0.0
        %193 = vmatprep.subr.mxu0 0.0
        %194 = vmatpush1.msra.mxu0 0.0
        %195 = vmatprep.subr.mxu0 0.0
        %196 = vmatpush1.msra.mxu0 0.0
        %197 = vmatprep.subr.mxu0 0.0
        %198 = vmatpush1.msra.mxu0 0.0
        %199 = vmatprep.subr.mxu0 0.0
        %200 = vmatpush1.msra.mxu0 0.0
        %201 = vmatprep.subr.mxu0 0.0
        %202 = vmatpush1.msra.mxu0 0.0
        %203 = vmatprep.subr.mxu0 0.0
        %204 = vmatpush1.msra.mxu0 0.0
        %205 = vmatprep.subr.mxu0 0.0
        %206 = vmatpush1.msra.mxu0 0.0
        %207 = vmatprep.subr.mxu0 0.0
        %208 = vmatpush1.msra.mxu0 0.0
        %209 = vmatprep.subr.mxu0 0.0
        %210 = vmatpush1.msra.mxu0 0.0
        %211 = vmatprep.subr.mxu0 0.0
        %212 = vmatpush1.msra.mxu0 0.0
        %213 = vmatprep.subr.mxu0 0.0
        %214 = vmatpush1.msra.mxu0 0.0
        %215 = vmatprep.subr.mxu0 0.0
        %216 = vmatpush1.msra.mxu0 %v169
        %217 = vmatprep.subr.mxu0 0.0
        %218 = vmatpush1.msra.mxu0 %v168
        %219 = vmatprep.subr.mxu0 0.0
        %220 = vmatpush2.msra.mxu0 0.0
        %221 = vmatprep.subr.mxu0 0.0
        %222 = vmatpush2.msra.mxu0 0.0
        %223 = vmatprep.subr.mxu0 0.0
        %224 = vmatpush2.msra.mxu0 0.0
        %225 = vmatprep.subr.mxu0 0.0
        %226 = vmatpush2.msra.mxu0 0.0
        %227 = vmatprep.subr.mxu0 0.0
        %228 = vmatpush2.msra.mxu0 0.0
        %229 = vmatprep.subr.mxu0 0.0
        %230 = vmatpush2.msra.mxu0 0.0
        %231 = vmatprep.subr.mxu0 0.0
        %232 = vmatpush2.msra.mxu0 0.0
        %233 = vmatprep.subr.mxu0 0.0
        %234 = vmatpush2.msra.mxu0 0.0
        %235 = vmatprep.subr.mxu0 0.0
        %236 = vmatpush2.msra.mxu0 0.0
        %237 = vmatprep.subr.mxu0 0.0
        %238 = vmatpush2.msra.mxu0 0.0
        %239 = vmatprep.subr.mxu0 0.0
        %240 = vmatpush2.msra.mxu0 0.0
        %241 = vmatprep.subr.mxu0 0.0
        %242 = vmatpush2.msra.mxu0 0.0
        %243 = vmatprep.subr.mxu0 0.0
        %244 = vmatpush2.msra.mxu0 0.0
        %245 = vmatprep.subr.mxu0 0.0
        %246 = vmatpush2.msra.mxu0 0.0
        %247 = vmatprep.subr.mxu0 0.0
        %248 = vmatpush2.msra.mxu0 0.0
        %249 = vmatprep.subr.mxu0 0.0
        %250 = vmatpush2.msra.mxu0 0.0
        %251 = vmatprep.mubr.f32.mxu0 0.0
        %252 = vmatmul.mubr.f32.gmra.mxu0 %v183
        %v253 = vpop.f32.mrf.mxu0
        %v254 = vadd.f32 %v175, %v253
        %v255 = vpop.f32.mrf.mxu0
        %256 = vmatprep.mubr.f32.mxu0 0.0
        %257 = vmatmul.mubr.f32.gmra.mxu0 %v185
        %v258 = vpop.f32.mrf.mxu0
        %v259 = vadd.f32 %v180, %v258
        %v260 = vpop.f32.mrf.mxu0
        %261 = vdwg.mxu0
        %v262 = vmax.f32 %v254, 0.0
        %v263 = vmax.f32 %v259, 0.0
        %p264 = scmp.eq.s32.totalorder %s13, 0
        // Predicated region
        $region67: #{discriminator_forward.4} parent=61 // pred_check
          %p265 = pneg %p264
        $region68: #{discriminator_forward.4} parent=61 // pred_check_branch
          %267 = sbr.rel (%p265) target = $region70
        $region69: #{discriminator_forward.4} parent=61 // pred_region
          %vm268 = vcmask 15360
          %269 = vst.msk [vmem:[%s2] sm:$0xff] %vm268, 0.0
          %270 = vst.msk [vmem:[%s2 + $0x8] sm:$0xff] %vm268, 0.0
        $region70: #{discriminator_forward.4} parent=61 // pred_fallthru
          _
        %s271 = smul.u32 %s13, 128
        %v272 = vlaneseq
        %v273 = vand.u32 %v272, 127
        %v274 = vstv %s271
        %v275 = vadd.s32 %v274, %v273
        %vm276 = vcmp.lt.s32.totalorder %v275, 300
        %v277 = vsel %vm276, %v262, 0.0
        %v278 = vsel %vm276, %v263, 0.0
        %v279 = vld [vmem:[%s2] sm:$0xff]
        %v280 = vld [vmem:[%s2 + $0x8] sm:$0xff]
        %281 = vadd.xlane.f32.xlu0 %v277
        %v282 = vpop.xlane.xlu0 %281
        %283 = vadd.xlane.f32.xlu0 %v278
        %v284 = vpop.xlane.xlu0 %283
        %v285 = vadd.f32 %v279, %v282
        %v286 = vadd.f32 %v280, %v284
        %vm287 = vcmask 7168
        %288 = vst.msk [vmem:[%s2] sm:$0xff] %vm287, %v285
        %289 = vst.msk [vmem:[%s2 + $0x8] sm:$0xff] %vm287, %v286
        %v290 = vld [vmem:[%s2] sm:$0xff]
        %v291 = vld [vmem:[%s2 + $0x8] sm:$0xff]
        %v292 = vmul.f32 %v277, %v277
        %v293 = vmul.f32 %v278, %v278
        %294 = vadd.xlane.f32.xlu0 %v292
        %v295 = vpop.xlane.xlu0 %294
        %296 = vadd.xlane.f32.xlu0 %v293
        %v297 = vpop.xlane.xlu0 %296
        %v298 = vadd.f32 %v290, %v295
        %v299 = vadd.f32 %v291, %v297
        %vm300 = vcmask 15368
        %301 = vst.msk [vmem:[%s2] sm:$0xff] %vm300, %v298
        %302 = vst.msk [vmem:[%s2 + $0x8] sm:$0xff] %vm300, %v299
        // Predicated region
        $region71: #{discriminator_forward.4} parent=61 // pred_check
          %p303 = pneg %p73
        $region72: #{discriminator_forward.4} parent=61 // pred_check_branch
          %305 = sbr.rel (%p303) target = $region74
        $region73: #{discriminator_forward.4} parent=61 // pred_region
          _
        $region74: #{discriminator_forward.4} parent=61 // pred_fallthru
          _
        // Predicated region
        $region75: #{discriminator_forward.4} parent=61 // pred_check
          %p306 = pneg %p73
        $region76: #{discriminator_forward.4} parent=61 // pred_check_branch
          %308 = sbr.rel (%p306) target = $region78
        $region77: #{discriminator_forward.4} parent=61 // pred_region
          _
        $region78: #{discriminator_forward.4} parent=61 // pred_fallthru
          _
      $region62: #{discriminator_forward.4} parent=5 // pred_fallthru
        _
      %p309 = scmp.le.s32.totalorder 2, %s8
      // Predicated region
      $region79: #{discriminator_forward.4} parent=5 // pred_check
        %p310 = pneg %p309
      $region80: #{discriminator_forward.4} parent=5 // pred_check_branch
        %312 = sbr.rel (%p310) target = $region82
      $region81: #{discriminator_forward.4} parent=5 // pred_region
        %s313 = ssub.s32 %s8, 2
      $region82: #{discriminator_forward.4} parent=5 // pred_fallthru
        _
    $region6: #{discriminator_forward.4} parent=1 // loop_footer
      %s12 = sadd.s32 1, %s8
    $region7: #{discriminator_forward.4} parent=1 // loop_footer_branch
      %7 = sbr.rel target = $region3
    $region8: #{discriminator_forward.4} parent=1 // loop_exit
      _

</llo_original>
